<compile_context>
chip_gen: v5e
topology: v5e:2x2
jax: 0.10.0
libtpu: 0.0.40
codegen_flags: <defaults>
</compile_context>

<pallas_src>
import functools

import jax
import jax.numpy as jnp
from jax.experimental import pallas as pl
from jax.experimental.pallas import tpu as pltpu


def _round_up(x, m):
    return (x + m - 1) // m * m


def _largest_divisor_leq(n, cap):
    cap = max(1, min(n, cap))
    for d in range(cap, 0, -1):
        if n % d == 0:
            return d
    return 1


def _make_conv_stats_kernel(TH, TH_in, Wo, Wp, Cin_p, KH, KW, Cout_p, stride):
    K = KH * KW * Cin_p

    def kernel(x_ref, w_ref, y_ref, stats_ref):
        # x_ref: (1, TH_in, Wp, Cin_p)  input tile (H halo included, full W)
        # w_ref: (K, Cout_p)            weights flattened as (kh, kw, cin) x cout
        x = x_ref[0]                                    # (TH_in, Wp, Cin_p)

        # im2col within the tile: KH*KW shifted windows concatenated along the
        # channel axis -> ONE dense contraction instead of KH*KW skinny dots.
        taps = []
        for kh in range(KH):
            for kw in range(KW):
                if stride == 1:
                    tap = x[kh:kh + TH, kw:kw + Wo, :]
                else:
                    # TODO(synk): strided in-kernel slicing only exercised at
                    # stride=1 in this script; validate lowering for stride>1.
                    tap = jax.lax.slice(
                        x,
                        (kh, kw, 0),
                        (kh + (TH - 1) * stride + 1,
                         kw + (Wo - 1) * stride + 1,
                         Cin_p),
                        (stride, stride, 1),
                    )
                taps.append(tap)
        patches = jnp.concatenate(taps, axis=-1).reshape(TH * Wo, K)

        # Single MXU matmul, f32 accumulation (operands stay in native dtype).
        y = jnp.dot(patches, w_ref[...], preferred_element_type=jnp.float32)

        y_ref[...] = y.reshape(1, TH, Wo, Cout_p).astype(y_ref.dtype)

        # Per-tile partial BN stats (sum, sum of squares); cross-tile reduce is
        # a few-KB host op, which keeps both grid axes "parallel"-safe.
        s = jnp.sum(y, axis=0, keepdims=True)           # (1, Cout_p)
        ss = jnp.sum(y * y, axis=0, keepdims=True)      # (1, Cout_p)
        stats_ref[...] = jnp.concatenate([s, ss], axis=0).reshape(1, 2, Cout_p)

    return kernel


def _make_bn_relu_kernel(Cout_p):
    def kernel(y_ref, scale_ref, shift_ref, o_ref):
        y = y_ref[...]                                   # (1, TH, Wo, Cout_p) f32
        scale = scale_ref[...].reshape(1, 1, 1, Cout_p)
        shift = shift_ref[...].reshape(1, 1, 1, Cout_p)
        o_ref[...] = jnp.maximum(y * scale + shift, 0.0).astype(o_ref.dtype)

    return kernel


@functools.partial(jax.jit, static_argnames=("stride", "padding", "eps"))
def conv_block_forward(x_nchw, w_oihw, gamma, beta, *, stride=1, padding=0, eps=1e-5):
    """Forward matching ConvBlock(in_ch, out_ch, k, stride, padding, bias=False,
    norm='batch', activation='relu') in training mode (normalization output)."""
    N, Cin, H, W = x_nchw.shape
    Cout, _, KH, KW = w_oihw.shape

    Hp, Wp = H + 2 * padding, W + 2 * padding
    Ho = (Hp - KH) // stride + 1
    Wo = (Wp - KW) // stride + 1

    Cin_p = _round_up(Cin, 8)        # sublane-friendly contraction packing
    Cout_p = _round_up(Cout, 128)    # lane-dense accumulator / stores
    K = KH * KW * Cin_p

    # Output-row tile: aim for ~128 im2col rows per grid step, TH | Ho.
    TH = _largest_divisor_leq(Ho, max(1, 128 // max(1, Wo)))
    n_th = Ho // TH
    TH_in = (TH - 1) * stride + KH   # input rows needed per tile (incl. halo)

    # Host-side layout glue (fused by XLA under jit): NCHW->NHWC, zero pad
    # (spatial + channel), and an H-gather that materializes per-tile input rows
    # with the halo so the kernel input is a plain non-overlapping BlockSpec.
    x_nhwc = jnp.transpose(x_nchw, (0, 2, 3, 1))
    x_pad = jnp.pad(
        x_nhwc, ((0, 0), (padding, padding), (padding, padding), (0, Cin_p - Cin))
    )
    row_idx = (jnp.arange(n_th) * (TH * stride))[:, None] + jnp.arange(TH_in)[None, :]
    x_tiles = x_pad[:, row_idx]                          # (N, n_th, TH_in, Wp, Cin_p)
    x_tiles = x_tiles.reshape(N * n_th, TH_in, Wp, Cin_p)

    w_hwio = jnp.transpose(w_oihw, (2, 3, 1, 0))         # (KH, KW, Cin, Cout)
    w_hwio = jnp.pad(w_hwio, ((0, 0), (0, 0), (0, Cin_p - Cin), (0, Cout_p - Cout)))
    w2d = w_hwio.reshape(K, Cout_p)

    conv_kernel = _make_conv_stats_kernel(
        TH, TH_in, Wo, Wp, Cin_p, KH, KW, Cout_p, stride
    )

    itemsize = x_tiles.dtype.itemsize
    flops1 = 2 * N * Ho * Wo * K * Cout_p
    bytes1 = (x_tiles.size * itemsize + w2d.size * w2d.dtype.itemsize
              + N * Ho * Wo * Cout_p * 4 + N * n_th * 2 * Cout_p * 4)

    # ---- Pass 1: tiled conv + partial BN statistics -------------------------
    y_conv, stats = pl.pallas_call(
        conv_kernel,
        out_shape=(
            jax.ShapeDtypeStruct((N, Ho, Wo, Cout_p), jnp.float32),
            jax.ShapeDtypeStruct((N * n_th, 2, Cout_p), jnp.float32),
        ),
        grid=(N, n_th),
        in_specs=[
            pl.BlockSpec((1, TH_in, Wp, Cin_p), lambda n, t: (n * n_th + t, 0, 0, 0)),
            pl.BlockSpec((K, Cout_p), lambda n, t: (0, 0)),
        ],
        out_specs=(
            pl.BlockSpec((1, TH, Wo, Cout_p), lambda n, t: (n, t, 0, 0)),
            pl.BlockSpec((1, 2, Cout_p), lambda n, t: (n * n_th + t, 0, 0)),
        ),
        compiler_params=pltpu.CompilerParams(
            dimension_semantics=("parallel", "parallel"),
            vmem_limit_bytes=32 * 1024 * 1024,
        ),
        cost_estimate=pl.CostEstimate(
            flops=flops1, transcendentals=0, bytes_accessed=bytes1
        ),
    )(x_tiles, w2d)

    # ---- Tiny cross-tile stats reduction + BN scale/shift (host, few KB) ----
    totals = jnp.sum(stats, axis=0)                       # (2, Cout_p)
    count = N * Ho * Wo
    mean = totals[0] / count
    var = jnp.maximum(totals[1] / count - mean * mean, 0.0)   # biased variance
    gamma_p = jnp.pad(gamma.astype(jnp.float32), (0, Cout_p - Cout))
    beta_p = jnp.pad(beta.astype(jnp.float32), (0, Cout_p - Cout))
    scale = gamma_p * jax.lax.rsqrt(var + eps)
    shift = beta_p - mean * scale

    # ---- Pass 2: tiled normalize + ReLU (lane-dense) -------------------------
    bn_kernel = _make_bn_relu_kernel(Cout_p)
    bytes2 = 2 * N * Ho * Wo * Cout_p * 4 + 2 * Cout_p * 4

    out_nhwc = pl.pallas_call(
        bn_kernel,
        out_shape=jax.ShapeDtypeStruct((N, Ho, Wo, Cout_p), x_nchw.dtype),
        grid=(N, n_th),
        in_specs=[
            pl.BlockSpec((1, TH, Wo, Cout_p), lambda n, t: (n, t, 0, 0)),
            pl.BlockSpec((1, Cout_p), lambda n, t: (0, 0)),
            pl.BlockSpec((1, Cout_p), lambda n, t: (0, 0)),
        ],
        out_specs=pl.BlockSpec((1, TH, Wo, Cout_p), lambda n, t: (n, t, 0, 0)),
        compiler_params=pltpu.CompilerParams(
            dimension_semantics=("parallel", "parallel"),
            vmem_limit_bytes=32 * 1024 * 1024,
        ),
        cost_estimate=pl.CostEstimate(
            flops=2 * N * Ho * Wo * Cout_p, transcendentals=0, bytes_accessed=bytes2
        ),
    )(y_conv, scale.reshape(1, Cout_p), shift.reshape(1, Cout_p))

    # Drop channel padding, NHWC -> NCHW to match PyTorch.
    # TODO(synk): BatchNorm2d running_mean/running_var state update not modeled
    # (forward-output parity only).
    return jnp.transpose(out_nhwc[..., :Cout], (0, 3, 1, 2))


def _reference_forward(x_nchw, w_oihw, gamma, beta, *, stride, padding, eps=1e-5):
    """Pure-JAX reference (lax conv + batchnorm + relu) for validation."""
    y = jax.lax.conv_general_dilated(
        x_nchw.astype(jnp.float32),
        w_oihw.astype(jnp.float32),
        window_strides=(stride, stride),
        padding=[(padding, padding), (padding, padding)],
        dimension_numbers=("NCHW", "OIHW", "NCHW"),
    )
    mean = jnp.mean(y, axis=(0, 2, 3), keepdims=True)
    var = jnp.mean((y - mean) ** 2, axis=(0, 2, 3), keepdims=True)
    y = (y - mean) * jax.lax.rsqrt(var + eps)
    y = y * gamma.reshape(1, -1, 1, 1) + beta.reshape(1, -1, 1, 1)
    return jnp.maximum(y, 0.0)


if __name__ == "__main__":
    # ConvBlock(in_ch=4, out_ch=8, kernel_size=3, stride=1, padding=1,
    #           bias=False, norm='batch', activation='relu')
    N, Cin, H, W = 2, 4, 16, 16
    Cout, Ksz, stride, padding = 8, 3, 1, 1

    key = jax.random.PRNGKey(0)
    kx, kw = jax.random.split(key)
    x = jax.random.normal(kx, (N, Cin, H, W), dtype=jnp.float32)
    w = jax.random.normal(kw, (Cout, Cin, Ksz, Ksz), dtype=jnp.float32) * 0.1
    gamma = jnp.ones((Cout,), dtype=jnp.float32)   # BatchNorm2d affine init
    beta = jnp.zeros((Cout,), dtype=jnp.float32)

    out = conv_block_forward(x, w, gamma, beta, stride=stride, padding=padding)
    out = jax.block_until_ready(out)

    ref = _reference_forward(x, w, gamma, beta, stride=stride, padding=padding)
    assert out.shape == (N, Cout, H, W), out.shape
    assert jnp.allclose(out, ref, atol=1e-4, rtol=1e-4), float(
        jnp.max(jnp.abs(out - ref))
    )

    print("KERNEL_OK")
</pallas_src>

<mosaic_0001>
module attributes {stable_mosaic.version = 11 : i64} {
  func.func @kernel(%arg0: i32, %arg1: i32, %arg2: memref<1x8x16x128xf32, #tpu.memory_space<vmem>>, %arg3: memref<1x128xf32, #tpu.memory_space<vmem>>, %arg4: memref<1x128xf32, #tpu.memory_space<vmem>>, %arg5: memref<1x8x16x128xf32, #tpu.memory_space<vmem>>) attributes {dimension_semantics = [#tpu.dimension_semantics<parallel>, #tpu.dimension_semantics<parallel>], iteration_bounds = array<i64: 2, 2>, scalar_prefetch = 0 : i64, scratch_operands = 0 : i64, tpu.core_type = #tpu.core_type<tc>, window_params = [{transform_indices = @transform_0, window_bounds = array<i64: 1, 8, 16, 128>}, {pipeline_mode = #tpu.pipeline_mode<synchronous>, transform_indices = @transform_1, window_bounds = array<i64: 1, 128>}, {pipeline_mode = #tpu.pipeline_mode<synchronous>, transform_indices = @transform_2, window_bounds = array<i64: 1, 128>}, {transform_indices = @transform_3, window_bounds = array<i64: 1, 8, 16, 128>}]} {
    %c0 = arith.constant 0 : index
    %c0_0 = arith.constant 0 : index
    %c0_1 = arith.constant 0 : index
    %c0_2 = arith.constant 0 : index
    %0 = vector.load %arg2[%c0, %c0_0, %c0_1, %c0_2] : memref<1x8x16x128xf32, #tpu.memory_space<vmem>>, vector<1x8x16x128xf32>
    %c0_3 = arith.constant 0 : index
    %c0_4 = arith.constant 0 : index
    %1 = vector.load %arg3[%c0_3, %c0_4] : memref<1x128xf32, #tpu.memory_space<vmem>>, vector<1x128xf32>
    %2 = vector.shape_cast %1 : vector<1x128xf32> to vector<1x1x1x128xf32>
    %c0_5 = arith.constant 0 : index
    %c0_6 = arith.constant 0 : index
    %3 = vector.load %arg4[%c0_5, %c0_6] : memref<1x128xf32, #tpu.memory_space<vmem>>, vector<1x128xf32>
    %4 = vector.shape_cast %3 : vector<1x128xf32> to vector<1x1x1x128xf32>
    %5 = vector.broadcast %2 : vector<1x1x1x128xf32> to vector<1x8x16x128xf32>
    %6 = arith.mulf %0, %5 : vector<1x8x16x128xf32>
    %7 = vector.broadcast %4 : vector<1x1x1x128xf32> to vector<1x8x16x128xf32>
    %8 = arith.addf %6, %7 : vector<1x8x16x128xf32>
    %cst = arith.constant 0.000000e+00 : f32
    %9 = vector.broadcast %cst : f32 to vector<1x8x16x128xf32>
    %10 = arith.maximumf %8, %9 : vector<1x8x16x128xf32>
    %c0_7 = arith.constant 0 : index
    %c0_8 = arith.constant 0 : index
    %c0_9 = arith.constant 0 : index
    %c0_10 = arith.constant 0 : index
    %11 = vector.load %arg5[%c0_7, %c0_8, %c0_9, %c0_10] : memref<1x8x16x128xf32, #tpu.memory_space<vmem>>, vector<1x8x16x128xf32>
    tpu.vector_store %arg5[%c0_7, %c0_8, %c0_9, %c0_10], %10 {strides = array<i32>} : memref<1x8x16x128xf32, #tpu.memory_space<vmem>>, vector<1x8x16x128xf32>,
    return
  }
  func.func @transform_0(%arg0: i32, %arg1: i32) -> (i32, i32, i32, i32) {
    %c0_i32 = arith.constant 0 : i32
    %c0_i32_0 = arith.constant 0 : i32
    %c0_i32_1 = arith.constant 0 : i32
    return %arg0, %arg1, %c0_i32, %c0_i32_0 : i32, i32, i32, i32
  }
  func.func @transform_1(%arg0: i32, %arg1: i32) -> (i32, i32) {
    %c0_i32 = arith.constant 0 : i32
    %c0_i32_0 = arith.constant 0 : i32
    %c0_i32_1 = arith.constant 0 : i32
    return %c0_i32, %c0_i32_0 : i32, i32
  }
  func.func @transform_2(%arg0: i32, %arg1: i32) -> (i32, i32) {
    %c0_i32 = arith.constant 0 : i32
    %c0_i32_0 = arith.constant 0 : i32
    %c0_i32_1 = arith.constant 0 : i32
    return %c0_i32, %c0_i32_0 : i32, i32
  }
  func.func @transform_3(%arg0: i32, %arg1: i32) -> (i32, i32, i32, i32) {
    %c0_i32 = arith.constant 0 : i32
    %c0_i32_0 = arith.constant 0 : i32
    %c0_i32_1 = arith.constant 0 : i32
    return %arg0, %arg1, %c0_i32, %c0_i32_0 : i32, i32, i32, i32
  }
}

module attributes {stable_mosaic.version = 11 : i64} {
  func.func @kernel(%arg0: i32, %arg1: i32, %arg2: memref<1x10x18x8xf32, #tpu.memory_space<vmem>>, %arg3: memref<72x128xf32, #tpu.memory_space<vmem>>, %arg4: memref<1x8x16x128xf32, #tpu.memory_space<vmem>>, %arg5: memref<1x2x128xf32, #tpu.memory_space<vmem>>) attributes {dimension_semantics = [#tpu.dimension_semantics<parallel>, #tpu.dimension_semantics<parallel>], iteration_bounds = array<i64: 2, 2>, scalar_prefetch = 0 : i64, scratch_operands = 0 : i64, tpu.core_type = #tpu.core_type<tc>, window_params = [{transform_indices = @transform_0, window_bounds = array<i64: 1, 10, 18, 8>}, {pipeline_mode = #tpu.pipeline_mode<synchronous>, transform_indices = @transform_1, window_bounds = array<i64: 72, 128>}, {transform_indices = @transform_2, window_bounds = array<i64: 1, 8, 16, 128>}, {transform_indices = @transform_3, window_bounds = array<i64: 1, 2, 128>}]} {
    %c0 = arith.constant 0 : index
    %c0_0 = arith.constant 0 : index
    %c0_1 = arith.constant 0 : index
    %c0_2 = arith.constant 0 : index
    %0 = vector.load %arg2[%c0, %c0_0, %c0_1, %c0_2] : memref<1x10x18x8xf32, #tpu.memory_space<vmem>>, vector<1x10x18x8xf32>
    %1 = vector.shape_cast %0 : vector<1x10x18x8xf32> to vector<10x18x8xf32>
    %2 = vector.extract_strided_slice %1 {offsets = [0, 0, 0], sizes = [8, 16, 8], strides = [1, 1, 1]} : vector<10x18x8xf32> to vector<8x16x8xf32>
    %3 = vector.extract_strided_slice %1 {offsets = [0, 1, 0], sizes = [8, 16, 8], strides = [1, 1, 1]} : vector<10x18x8xf32> to vector<8x16x8xf32>
    %4 = vector.extract_strided_slice %1 {offsets = [0, 2, 0], sizes = [8, 16, 8], strides = [1, 1, 1]} : vector<10x18x8xf32> to vector<8x16x8xf32>
    %5 = vector.extract_strided_slice %1 {offsets = [1, 0, 0], sizes = [8, 16, 8], strides = [1, 1, 1]} : vector<10x18x8xf32> to vector<8x16x8xf32>
    %6 = vector.extract_strided_slice %1 {offsets = [1, 1, 0], sizes = [8, 16, 8], strides = [1, 1, 1]} : vector<10x18x8xf32> to vector<8x16x8xf32>
    %7 = vector.extract_strided_slice %1 {offsets = [1, 2, 0], sizes = [8, 16, 8], strides = [1, 1, 1]} : vector<10x18x8xf32> to vector<8x16x8xf32>
    %8 = vector.extract_strided_slice %1 {offsets = [2, 0, 0], sizes = [8, 16, 8], strides = [1, 1, 1]} : vector<10x18x8xf32> to vector<8x16x8xf32>
    %9 = vector.extract_strided_slice %1 {offsets = [2, 1, 0], sizes = [8, 16, 8], strides = [1, 1, 1]} : vector<10x18x8xf32> to vector<8x16x8xf32>
    %10 = vector.extract_strided_slice %1 {offsets = [2, 2, 0], sizes = [8, 16, 8], strides = [1, 1, 1]} : vector<10x18x8xf32> to vector<8x16x8xf32>
    %11 = tpu.concatenate %2, %3, %4, %5, %6, %7, %8, %9, %10 in 2 : vector<8x16x8xf32>, vector<8x16x8xf32>, vector<8x16x8xf32>, vector<8x16x8xf32>, vector<8x16x8xf32>, vector<8x16x8xf32>, vector<8x16x8xf32>, vector<8x16x8xf32>, vector<8x16x8xf32> -> vector<8x16x72xf32>
    %12 = vector.shape_cast %11 : vector<8x16x72xf32> to vector<128x72xf32>
    %c0_3 = arith.constant 0 : index
    %c0_4 = arith.constant 0 : index
    %13 = vector.load %arg3[%c0_3, %c0_4] : memref<72x128xf32, #tpu.memory_space<vmem>>, vector<72x128xf32>
    %cst = arith.constant dense<0.000000e+00> : vector<128x128xf32>
    %14 = tpu.matmul %12, %13, %cst {dimension_numbers = #tpu.dot_dimension_numbers<[1], [0], [0], [1], [0, 0, 1, 1], [], []>} : vector<128x72xf32>, vector<72x128xf32>, vector<128x128xf32> -> vector<128x128xf32>
    %15 = vector.shape_cast %14 : vector<128x128xf32> to vector<1x8x16x128xf32>
    %c0_5 = arith.constant 0 : index
    %c0_6 = arith.constant 0 : index
    %c0_7 = arith.constant 0 : index
    %c0_8 = arith.constant 0 : index
    %16 = vector.load %arg4[%c0_5, %c0_6, %c0_7, %c0_8] : memref<1x8x16x128xf32, #tpu.memory_space<vmem>>, vector<1x8x16x128xf32>
    tpu.vector_store %arg4[%c0_5, %c0_6, %c0_7, %c0_8], %15 {strides = array<i32>} : memref<1x8x16x128xf32, #tpu.memory_space<vmem>>, vector<1x8x16x128xf32>,
    %cst_9 = arith.constant dense<0.000000e+00> : vector<128xf32>
    %17 = vector.multi_reduction <add>, %14, %cst_9 [0] : vector<128x128xf32> to vector<128xf32>
    %18 = vector.shape_cast %17 : vector<128xf32> to vector<1x128xf32>
    %19 = arith.mulf %14, %14 : vector<128x128xf32>
    %cst_10 = arith.constant dense<0.000000e+00> : vector<128xf32>
    %20 = vector.multi_reduction <add>, %19, %cst_10 [0] : vector<128x128xf32> to vector<128xf32>
    %21 = vector.shape_cast %20 : vector<128xf32> to vector<1x128xf32>
    %22 = tpu.concatenate %18, %21 in 0 : vector<1x128xf32>, vector<1x128xf32> -> vector<2x128xf32>
    %23 = vector.shape_cast %22 : vector<2x128xf32> to vector<1x2x128xf32>
    %c0_11 = arith.constant 0 : index
    %c0_12 = arith.constant 0 : index
    %c0_13 = arith.constant 0 : index
    %24 = vector.load %arg5[%c0_11, %c0_12, %c0_13] : memref<1x2x128xf32, #tpu.memory_space<vmem>>, vector<1x2x128xf32>
    tpu.vector_store %arg5[%c0_11, %c0_12, %c0_13], %23 {strides = array<i32>} : memref<1x2x128xf32, #tpu.memory_space<vmem>>, vector<1x2x128xf32>,
    return
  }
  func.func @transform_0(%arg0: i32, %arg1: i32) -> (i32, i32, i32, i32) {
    %c2_i32 = arith.constant 2 : i32
    %0 = arith.muli %arg0, %c2_i32 : i32
    %1 = arith.addi %0, %arg1 : i32
    %c0_i32 = arith.constant 0 : i32
    %c0_i32_0 = arith.constant 0 : i32
    %c0_i32_1 = arith.constant 0 : i32
    %c0_i32_2 = arith.constant 0 : i32
    return %1, %c0_i32, %c0_i32_0, %c0_i32_1 : i32, i32, i32, i32
  }
  func.func @transform_1(%arg0: i32, %arg1: i32) -> (i32, i32) {
    %c0_i32 = arith.constant 0 : i32
    %c0_i32_0 = arith.constant 0 : i32
    %c0_i32_1 = arith.constant 0 : i32
    return %c0_i32, %c0_i32_0 : i32, i32
  }
  func.func @transform_2(%arg0: i32, %arg1: i32) -> (i32, i32, i32, i32) {
    %c0_i32 = arith.constant 0 : i32
    %c0_i32_0 = arith.constant 0 : i32
    %c0_i32_1 = arith.constant 0 : i32
    return %arg0, %arg1, %c0_i32, %c0_i32_0 : i32, i32, i32, i32
  }
  func.func @transform_3(%arg0: i32, %arg1: i32) -> (i32, i32, i32) {
    %c2_i32 = arith.constant 2 : i32
    %0 = arith.muli %arg0, %c2_i32 : i32
    %1 = arith.addi %0, %arg1 : i32
    %c0_i32 = arith.constant 0 : i32
    %c0_i32_0 = arith.constant 0 : i32
    %c0_i32_1 = arith.constant 0 : i32
    return %1, %c0_i32, %c0_i32_0 : i32, i32, i32
  }
}

</mosaic_0001>

<llo_original>
// kernel: conv_block_forward.3
$region0: #{conv_block_forward.3}
  #allocation0 [shape = 'u32[]', space=smem, size = 0x4, offset = 0x4, fixed_abs, tag = 'smem constant byte address 0x4 - core index']
  #allocation1 [shape = 'u32[72,128]{1,0:T(1,128)}', space=vmem, size = 0x9000, scoped, tag = 'internal scratch']
  %s0 = inlined_call_operand.vmem [shape: f32[2,16,16,128], index: 0, kind: input, shape index: {}]
  %s1 = inlined_call_operand.vmem [shape: f32[1,128], index: 1, kind: input, shape index: {}]
  %s2 = inlined_call_operand.vmem [shape: f32[1,128], index: 2, kind: input, shape index: {}]
  %s3 = inlined_call_operand.vmem [shape: f32[2,16,16,128], index: 3, kind: output, shape index: {}]
  %s4 = sld [smem:[#allocation0]]
  $region45: #{conv_block_forward.3} parent=0
    _
  %s6 = ssub.s32 1, %s4
  %s7 = scalar_select 0, %s6, %s4
  loop: start=0, step=1, limit=6
  $region2: #{conv_block_forward.3} parent=0 // loop_pre_header
    _
  $region3: #{conv_block_forward.3} parent=0 // loop_header
    %s9 = sphi 0, %s13
    %p10 = scmp.ge.s32.totalorder %s9, 6
    %s16 = sphi 0, %s28
    %s17 = sphi 0, %s24
    %s18 = sphi 0, %s16
    %s19 = sphi 0, %s17
    %s20 = sphi 0, %s18
    %s21 = sphi 0, %s19
    %s33 = sphi 0, %s35
    %s36 = sphi 0, %s33
    %s37 = sphi 0, %s36
    %s53 = sphi 0, %s37
    %s57 = sphi 0, %s57
    %s59 = sphi 0, %s57
    %s60 = sphi 0, %s59
    %s74 = sphi 0, %s60
    %s78 = sphi 0, %s78
    %s80 = sphi 0, %s78
    %s81 = sphi 0, %s80
    %s95 = sphi 0, %s81
    %s103 = sphi 0, %s105
    %s106 = sphi 0, %s103
    %s107 = sphi 0, %s106
    %s123 = sphi 0, %s107
  $region4: #{conv_block_forward.3} parent=0 // loop_header_branch
    %12 = sbr.rel (%p10) target = $region8
  $region5: #{conv_block_forward.3} parent=0 // loop_body
    %s14 = ssub.s32 %s9, 1
    %s15 = ssub.s32 %s9, 2
    %s22 = sadd.s32 1, %s17
    %p23 = scmp.ge.s32.totalorder %s22, 2
    %s24 = scalar_select %p23, 0, %s22
    %s25 = sadd.s32 1, %s16
    %s26 = scalar_select %p23, %s25, %s16
    %p27 = scmp.ge.s32.totalorder %s26, 2
    %s28 = scalar_select %p27, 0, %s26
    %s29 = ssub.s32 %s16, %s28
    %s30 = ssub.s32 %s17, %s24
    %s31 = sor.u32 %s29, %s30
    %p32 = scmp.eq.s32.totalorder %s31, 0
    %s34 = sadd.s32 %s33, 1
    %s35 = scalar_select %p32, %s33, %s34
    %p38 = pneg %p32
    %p39 = scmp.eq.s32.totalorder %s9, 3
    %p40 = por %p38, %p39
    %p41 = scmp.ne.s32.totalorder %s33, %s36
    %p42 = scmp.eq.s32.totalorder %s9, 0
    %p43 = por %p41, %p42
    %p44 = scmp.ne.s32.totalorder %s33, %s36
    %p45 = scmp.eq.s32.totalorder %s14, 3
    %p46 = por %p44, %p45
    %p47 = scmp.ne.s32.totalorder %s36, %s37
    %p48 = scmp.eq.s32.totalorder %s14, 0
    %p49 = por %p47, %p48
    %p50 = scmp.ne.s32.totalorder %s36, %s37
    %p51 = scmp.eq.s32.totalorder %s15, 3
    %p52 = por %p50, %p51
    %p54 = scmp.ne.s32.totalorder %s37, %s53
    %p55 = scmp.eq.s32.totalorder %s15, 0
    %p56 = por %p54, %p55
    %s58 = sadd.s32 %s57, 1
    %p61 = scmp.eq.s32.totalorder %s9, 3
    %p62 = scmp.ne.s32.totalorder %s57, %s59
    %p63 = scmp.eq.s32.totalorder %s9, 0
    %p64 = por %p62, %p63
    %p65 = scmp.ne.s32.totalorder %s57, %s59
    %p66 = scmp.eq.s32.totalorder %s14, 3
    %p67 = por %p65, %p66
    %p68 = scmp.ne.s32.totalorder %s59, %s60
    %p69 = scmp.eq.s32.totalorder %s14, 0
    %p70 = por %p68, %p69
    %p71 = scmp.ne.s32.totalorder %s59, %s60
    %p72 = scmp.eq.s32.totalorder %s15, 3
    %p73 = por %p71, %p72
    %p75 = scmp.ne.s32.totalorder %s60, %s74
    %p76 = scmp.eq.s32.totalorder %s15, 0
    %p77 = por %p75, %p76
    %s79 = sadd.s32 %s78, 1
    %p82 = scmp.eq.s32.totalorder %s9, 3
    %p83 = scmp.ne.s32.totalorder %s78, %s80
    %p84 = scmp.eq.s32.totalorder %s9, 0
    %p85 = por %p83, %p84
    %p86 = scmp.ne.s32.totalorder %s78, %s80
    %p87 = scmp.eq.s32.totalorder %s14, 3
    %p88 = por %p86, %p87
    %p89 = scmp.ne.s32.totalorder %s80, %s81
    %p90 = scmp.eq.s32.totalorder %s14, 0
    %p91 = por %p89, %p90
    %p92 = scmp.ne.s32.totalorder %s80, %s81
    %p93 = scmp.eq.s32.totalorder %s15, 3
    %p94 = por %p92, %p93
    %p96 = scmp.ne.s32.totalorder %s81, %s95
    %p97 = scmp.eq.s32.totalorder %s15, 0
    %p98 = por %p96, %p97
    %s99 = ssub.s32 %s16, %s28
    %s100 = ssub.s32 %s17, %s24
    %s101 = sor.u32 %s99, %s100
    %p102 = scmp.eq.s32.totalorder %s101, 0
    %s104 = sadd.s32 %s103, 1
    %s105 = scalar_select %p102, %s103, %s104
    %p108 = pneg %p102
    %p109 = scmp.eq.s32.totalorder %s9, 3
    %p110 = por %p108, %p109
    %p111 = scmp.ne.s32.totalorder %s103, %s106
    %p112 = scmp.eq.s32.totalorder %s9, 0
    %p113 = por %p111, %p112
    %p114 = scmp.ne.s32.totalorder %s103, %s106
    %p115 = scmp.eq.s32.totalorder %s14, 3
    %p116 = por %p114, %p115
    %p117 = scmp.ne.s32.totalorder %s106, %s107
    %p118 = scmp.eq.s32.totalorder %s14, 0
    %p119 = por %p117, %p118
    %p120 = scmp.ne.s32.totalorder %s106, %s107
    %p121 = scmp.eq.s32.totalorder %s15, 3
    %p122 = por %p120, %p121
    %p124 = scmp.ne.s32.totalorder %s107, %s123
    %p125 = scmp.eq.s32.totalorder %s15, 0
    %p126 = por %p124, %p125
    %p127 = scmp.le.s32.totalorder 1, %s9
    %p128 = scmp.lt.s32.totalorder %s9, 5
    %p129 = pnand %p127, %p128
    %p130 = pneg %p129
    // Predicated region
    $region9: #{conv_block_forward.3} parent=5 // pred_check
      _
    $region10: #{conv_block_forward.3} parent=5 // pred_check_branch
      %132 = sbr.rel (%p129) target = $region12
    $region11: #{conv_block_forward.3} parent=5 // pred_region
      %s133 = ssub.s32 %s9, 1
      // Predicated region
      $region13: #{conv_block_forward.3} parent=11 // pred_check
        %p134 = pneg %p70
      $region14: #{conv_block_forward.3} parent=11 // pred_check_branch
        %136 = sbr.rel (%p134) target = $region16
      $region15: #{conv_block_forward.3} parent=11 // pred_region
        _
      $region16: #{conv_block_forward.3} parent=11 // pred_fallthru
        _
      // Predicated region
      $region17: #{conv_block_forward.3} parent=11 // pred_check
        %p137 = pneg %p91
      $region18: #{conv_block_forward.3} parent=11 // pred_check_branch
        %139 = sbr.rel (%p137) target = $region20
      $region19: #{conv_block_forward.3} parent=11 // pred_region
        _
      $region20: #{conv_block_forward.3} parent=11 // pred_fallthru
        _
    $region12: #{conv_block_forward.3} parent=5 // pred_fallthru
      _
    %p140 = scmp.lt.s32.totalorder %s9, 4
    // Predicated region
    $region21: #{conv_block_forward.3} parent=5 // pred_check
      %p141 = pneg %p140
    $region22: #{conv_block_forward.3} parent=5 // pred_check_branch
      %143 = sbr.rel (%p141) target = $region24
    $region23: #{conv_block_forward.3} parent=5 // pred_region
      // Predicated region
      $region25: #{conv_block_forward.3} parent=23 // pred_check
        %p144 = pneg %p43
      $region26: #{conv_block_forward.3} parent=23 // pred_check_branch
        %146 = sbr.rel (%p144) target = $region28
      $region27: #{conv_block_forward.3} parent=23 // pred_region
        %s147 = smul.u32 8, %s17
        %p148 = scmp.lt.s32.totalorder %s16, 1
        %s149 = scalar_select %p148, %s16, 1
        %p150 = scmp.lt.s32.totalorder %s147, 15
        %s151 = scalar_select %p150, %s147, 15
        %s152 = smul.addr %s151, 2
        %s153 = smul.addr %s149, 32
        %s154 = sadd.s32 %s152, %s153
        %s155 = smul.addr %s154, 8
        %s156 = scalar_lea.vmem %s0, %s155
        %s157 = smul.u32 8, %s17
      $region28: #{conv_block_forward.3} parent=23 // pred_fallthru
        _
    $region24: #{conv_block_forward.3} parent=5 // pred_fallthru
      _
    %p158 = scmp.le.s32.totalorder 1, %s9
    %p159 = scmp.lt.s32.totalorder %s9, 5
    %p160 = pnand %p158, %p159
    %p161 = pneg %p160
    // Predicated region
    $region29: #{conv_block_forward.3} parent=5 // pred_check
      _
    $region30: #{conv_block_forward.3} parent=5 // pred_check_branch
      %163 = sbr.rel (%p160) target = $region32
    $region31: #{conv_block_forward.3} parent=5 // pred_region
      %s164 = ssub.s32 %s9, 1
      %s165 = smul.u32 8, %s19
      %p166 = scmp.lt.s32.totalorder %s18, 1
      %s167 = scalar_select %p166, %s18, 1
      %p168 = scmp.lt.s32.totalorder %s165, 15
      %s169 = scalar_select %p168, %s165, 15
      %s170 = smul.addr %s169, 2
      %s171 = smul.addr %s167, 32
      %s172 = sadd.s32 %s170, %s171
      %s173 = smul.addr %s172, 8
      %s174 = scalar_lea.vmem %s0, %s173
      %p175 = pneg %p49
      %p176 = pneg %p46
      %p177 = pneg %p70
      %p178 = pneg %p67
      %p179 = pneg %p91
      %p180 = pneg %p88
      %p181 = pneg %p119
      %p182 = pneg %p116
      %s183 = smul.u32 8, %s19
      %p184 = scmp.lt.s32.totalorder %s18, 1
      %s185 = scalar_select %p184, %s18, 1
      %p186 = scmp.lt.s32.totalorder %s183, 15
      %s187 = scalar_select %p186, %s183, 15
      %s188 = smul.addr %s187, 2
      %s189 = smul.addr %s185, 32
      %s190 = sadd.s32 %s188, %s189
      %s191 = smul.addr %s190, 8
      %s192 = scalar_lea.vmem %s3, %s191
      %s193 = smul.u32 8, %s19
      %p194 = scmp.lt.s32.totalorder %s18, 1
      %s195 = scalar_select %p194, %s18, 1
      %p196 = scmp.lt.s32.totalorder %s193, 15
      %s197 = scalar_select %p196, %s193, 15
      %s198 = smul.addr %s197, 2
      %s199 = smul.addr %s195, 32
      %s200 = sadd.s32 %s198, %s199
      %s201 = smul.addr %s200, 8
      %s202 = scalar_lea.vmem %s0, %s201
      %s203 = smul.u32 8, %s19
      %s204 = smul.u32 8, %s19
      %p205 = scmp.lt.s32.totalorder %s18, 1
      %s206 = scalar_select %p205, %s18, 1
      %p207 = scmp.lt.s32.totalorder %s204, 15
      %s208 = scalar_select %p207, %s204, 15
      %s209 = smul.addr %s208, 2
      %s210 = smul.addr %s206, 32
      %s211 = sadd.s32 %s209, %s210
      %s212 = smul.addr %s211, 8
      %s213 = scalar_lea.vmem %s3, %s212
      %s214 = smul.u32 8, %s19
      %v215 = vld [vmem:[%s202] sm:$0xff]
      %v216 = vld [vmem:[%s202 + $0x8] sm:$0xff]
      %v217 = vld [vmem:[%s202 + $0x10] sm:$0xff]
      %v218 = vld [vmem:[%s202 + $0x18] sm:$0xff]
      %v219 = vld [vmem:[%s202 + $0x20] sm:$0xff]
      %v220 = vld [vmem:[%s202 + $0x28] sm:$0xff]
      %v221 = vld [vmem:[%s202 + $0x30] sm:$0xff]
      %v222 = vld [vmem:[%s202 + $0x38] sm:$0xff]
      %v223 = vld [vmem:[%s202 + $0x40] sm:$0xff]
      %v224 = vld [vmem:[%s202 + $0x48] sm:$0xff]
      %v225 = vld [vmem:[%s202 + $0x50] sm:$0xff]
      %v226 = vld [vmem:[%s202 + $0x58] sm:$0xff]
      %v227 = vld [vmem:[%s202 + $0x60] sm:$0xff]
      %v228 = vld [vmem:[%s202 + $0x68] sm:$0xff]
      %v229 = vld [vmem:[%s202 + $0x70] sm:$0xff]
      %v230 = vld [vmem:[%s202 + $0x78] sm:$0xff]
      %v231 = vld [vmem:[%s1] sm:$0x1]
      %v232 = vld [vmem:[%s2] sm:$0x1]
      %v234 = vperm.slane %v231, 0
      %v236 = vmul.f32 %v215, %v234
      %v237 = vmul.f32 %v216, %v234
      %v238 = vmul.f32 %v217, %v234
      %v239 = vmul.f32 %v218, %v234
      %v240 = vmul.f32 %v219, %v234
      %v241 = vmul.f32 %v220, %v234
      %v242 = vmul.f32 %v221, %v234
      %v243 = vmul.f32 %v222, %v234
      %v244 = vmul.f32 %v223, %v234
      %v245 = vmul.f32 %v224, %v234
      %v246 = vmul.f32 %v225, %v234
      %v247 = vmul.f32 %v226, %v234
      %v248 = vmul.f32 %v227, %v234
      %v249 = vmul.f32 %v228, %v234
      %v250 = vmul.f32 %v229, %v234
      %v251 = vmul.f32 %v230, %v234
      %v253 = vperm.slane %v232, 0
      %v255 = vadd.f32 %v236, %v253
      %v256 = vadd.f32 %v237, %v253
      %v257 = vadd.f32 %v238, %v253
      %v258 = vadd.f32 %v239, %v253
      %v259 = vadd.f32 %v240, %v253
      %v260 = vadd.f32 %v241, %v253
      %v261 = vadd.f32 %v242, %v253
      %v262 = vadd.f32 %v243, %v253
      %v263 = vadd.f32 %v244, %v253
      %v264 = vadd.f32 %v245, %v253
      %v265 = vadd.f32 %v246, %v253
      %v266 = vadd.f32 %v247, %v253
      %v267 = vadd.f32 %v248, %v253
      %v268 = vadd.f32 %v249, %v253
      %v269 = vadd.f32 %v250, %v253
      %v270 = vadd.f32 %v251, %v253
      %v271 = vmax.f32 %v255, 0.0
      %v272 = vmax.f32 %v256, 0.0
      %v273 = vmax.f32 %v257, 0.0
      %v274 = vmax.f32 %v258, 0.0
      %v275 = vmax.f32 %v259, 0.0
      %v276 = vmax.f32 %v260, 0.0
      %v277 = vmax.f32 %v261, 0.0
      %v278 = vmax.f32 %v262, 0.0
      %v279 = vmax.f32 %v263, 0.0
      %v280 = vmax.f32 %v264, 0.0
      %v281 = vmax.f32 %v265, 0.0
      %v282 = vmax.f32 %v266, 0.0
      %v283 = vmax.f32 %v267, 0.0
      %v284 = vmax.f32 %v268, 0.0
      %v285 = vmax.f32 %v269, 0.0
      %v286 = vmax.f32 %v270, 0.0
      %287 = vst [vmem:[%s213] sm:$0xff] %v271
      %288 = vst [vmem:[%s213 + $0x8] sm:$0xff] %v272
      %289 = vst [vmem:[%s213 + $0x10] sm:$0xff] %v273
      %290 = vst [vmem:[%s213 + $0x18] sm:$0xff] %v274
      %291 = vst [vmem:[%s213 + $0x20] sm:$0xff] %v275
      %292 = vst [vmem:[%s213 + $0x28] sm:$0xff] %v276
      %293 = vst [vmem:[%s213 + $0x30] sm:$0xff] %v277
      %294 = vst [vmem:[%s213 + $0x38] sm:$0xff] %v278
      %295 = vst [vmem:[%s213 + $0x40] sm:$0xff] %v279
      %296 = vst [vmem:[%s213 + $0x48] sm:$0xff] %v280
      %297 = vst [vmem:[%s213 + $0x50] sm:$0xff] %v281
      %298 = vst [vmem:[%s213 + $0x58] sm:$0xff] %v282
      %299 = vst [vmem:[%s213 + $0x60] sm:$0xff] %v283
      %300 = vst [vmem:[%s213 + $0x68] sm:$0xff] %v284
      %301 = vst [vmem:[%s213 + $0x70] sm:$0xff] %v285
      %302 = vst [vmem:[%s213 + $0x78] sm:$0xff] %v286
      %s303 = smul.u32 8, %s19
      %p304 = scmp.lt.s32.totalorder %s18, 1
      %s305 = scalar_select %p304, %s18, 1
      %p306 = scmp.lt.s32.totalorder %s303, 15
      %s307 = scalar_select %p306, %s303, 15
      %s308 = smul.addr %s307, 2
      %s309 = smul.addr %s305, 32
      %s310 = sadd.s32 %s308, %s309
      %s311 = smul.addr %s310, 8
      %s312 = scalar_lea.vmem %s3, %s311
      // Predicated region
      $region33: #{conv_block_forward.3} parent=31 // pred_check
        %p313 = pneg %p116
      $region34: #{conv_block_forward.3} parent=31 // pred_check_branch
        %315 = sbr.rel (%p313) target = $region36
      $region35: #{conv_block_forward.3} parent=31 // pred_region
        %s316 = smul.u32 8, %s19
      $region36: #{conv_block_forward.3} parent=31 // pred_fallthru
        _
    $region32: #{conv_block_forward.3} parent=5 // pred_fallthru
      _
    %p317 = scmp.le.s32.totalorder 2, %s9
    // Predicated region
    $region37: #{conv_block_forward.3} parent=5 // pred_check
      %p318 = pneg %p317
    $region38: #{conv_block_forward.3} parent=5 // pred_check_branch
      %320 = sbr.rel (%p318) target = $region40
    $region39: #{conv_block_forward.3} parent=5 // pred_region
      %s321 = ssub.s32 %s9, 2
      // Predicated region
      $region41: #{conv_block_forward.3} parent=39 // pred_check
        %p322 = pneg %p122
      $region42: #{conv_block_forward.3} parent=39 // pred_check_branch
        %324 = sbr.rel (%p322) target = $region44
      $region43: #{conv_block_forward.3} parent=39 // pred_region
        %s325 = smul.u32 8, %s21
        %p326 = scmp.lt.s32.totalorder %s20, 1
        %s327 = scalar_select %p326, %s20, 1
        %p328 = scmp.lt.s32.totalorder %s325, 15
        %s329 = scalar_select %p328, %s325, 15
        %s330 = smul.addr %s329, 2
        %s331 = smul.addr %s327, 32
        %s332 = sadd.s32 %s330, %s331
        %s333 = smul.addr %s332, 8
        %s334 = scalar_lea.vmem %s3, %s333
      $region44: #{conv_block_forward.3} parent=39 // pred_fallthru
        _
    $region40: #{conv_block_forward.3} parent=5 // pred_fallthru
      _
  $region6: #{conv_block_forward.3} parent=0 // loop_footer
    %s13 = sadd.s32 1, %s9
  $region7: #{conv_block_forward.3} parent=0 // loop_footer_branch
    %8 = sbr.rel target = $region3
  $region8: #{conv_block_forward.3} parent=0 // loop_exit
    _

// kernel: conv_block_forward.2
$region0: #{conv_block_forward.2}
  #allocation0 [shape = 'u32[]', space=smem, size = 0x4, offset = 0x4, fixed_abs, tag = 'smem constant byte address 0x4 - core index']
  #allocation1 [shape = 'u32[72,128]{1,0:T(1,128)}', space=vmem, size = 0x9000, scoped, tag = 'internal scratch']
  %s0 = inlined_call_operand.vmem [shape: f32[4,10,18,8], index: 0, kind: input, shape index: {}]
  %s1 = inlined_call_operand.vmem [shape: f32[72,128], index: 1, kind: input, shape index: {}]
  %s2 = inlined_call_operand.vmem [shape: f32[2,16,16,128], index: 2, kind: output, shape index: {0}]
  %s3 = inlined_call_operand.vmem [shape: f32[4,2,128], index: 3, kind: output, shape index: {1}]
  %4 = xla_tuple %s2, %s3
  %s5 = sld [smem:[#allocation0]]
  $region49: #{conv_block_forward.2} parent=0
    _
  %s7 = ssub.s32 1, %s5
  %s8 = scalar_select 0, %s7, %s5
  loop: start=0, step=1, limit=6
  $region2: #{conv_block_forward.2} parent=0 // loop_pre_header
    _
  $region3: #{conv_block_forward.2} parent=0 // loop_header
    %s10 = sphi 0, %s14
    %p11 = scmp.ge.s32.totalorder %s10, 6
    %s17 = sphi 0, %s29
    %s18 = sphi 0, %s25
    %s19 = sphi 0, %s17
    %s20 = sphi 0, %s18
    %s21 = sphi 0, %s19
    %s22 = sphi 0, %s20
    %s36 = sphi 0, %s38
    %s39 = sphi 0, %s36
    %s40 = sphi 0, %s39
    %s56 = sphi 0, %s40
    %s60 = sphi 0, %s60
    %s62 = sphi 0, %s60
    %s63 = sphi 0, %s62
    %s77 = sphi 0, %s63
    %s85 = sphi 0, %s87
    %s88 = sphi 0, %s85
    %s89 = sphi 0, %s88
    %s105 = sphi 0, %s89
    %s115 = sphi 0, %s117
    %s118 = sphi 0, %s115
    %s119 = sphi 0, %s118
    %s135 = sphi 0, %s119
  $region4: #{conv_block_forward.2} parent=0 // loop_header_branch
    %13 = sbr.rel (%p11) target = $region8
  $region5: #{conv_block_forward.2} parent=0 // loop_body
    %s15 = ssub.s32 %s10, 1
    %s16 = ssub.s32 %s10, 2
    %s23 = sadd.s32 1, %s18
    %p24 = scmp.ge.s32.totalorder %s23, 2
    %s25 = scalar_select %p24, 0, %s23
    %s26 = sadd.s32 1, %s17
    %s27 = scalar_select %p24, %s26, %s17
    %p28 = scmp.ge.s32.totalorder %s27, 2
    %s29 = scalar_select %p28, 0, %s27
    %s30 = smul.u32 %s17, 2
    %s31 = sadd.s32 %s30, %s18
    %s32 = smul.u32 %s29, 2
    %s33 = sadd.s32 %s32, %s25
    %s34 = ssub.s32 %s31, %s33
    %p35 = scmp.eq.s32.totalorder %s34, 0
    %s37 = sadd.s32 %s36, 1
    %s38 = scalar_select %p35, %s36, %s37
    %p41 = pneg %p35
    %p42 = scmp.eq.s32.totalorder %s10, 3
    %p43 = por %p41, %p42
    %p44 = scmp.ne.s32.totalorder %s36, %s39
    %p45 = scmp.eq.s32.totalorder %s10, 0
    %p46 = por %p44, %p45
    %p47 = scmp.ne.s32.totalorder %s36, %s39
    %p48 = scmp.eq.s32.totalorder %s15, 3
    %p49 = por %p47, %p48
    %p50 = scmp.ne.s32.totalorder %s39, %s40
    %p51 = scmp.eq.s32.totalorder %s15, 0
    %p52 = por %p50, %p51
    %p53 = scmp.ne.s32.totalorder %s39, %s40
    %p54 = scmp.eq.s32.totalorder %s16, 3
    %p55 = por %p53, %p54
    %p57 = scmp.ne.s32.totalorder %s40, %s56
    %p58 = scmp.eq.s32.totalorder %s16, 0
    %p59 = por %p57, %p58
    %s61 = sadd.s32 %s60, 1
    %p64 = scmp.eq.s32.totalorder %s10, 3
    %p65 = scmp.ne.s32.totalorder %s60, %s62
    %p66 = scmp.eq.s32.totalorder %s10, 0
    %p67 = por %p65, %p66
    %p68 = scmp.ne.s32.totalorder %s60, %s62
    %p69 = scmp.eq.s32.totalorder %s15, 3
    %p70 = por %p68, %p69
    %p71 = scmp.ne.s32.totalorder %s62, %s63
    %p72 = scmp.eq.s32.totalorder %s15, 0
    %p73 = por %p71, %p72
    %p74 = scmp.ne.s32.totalorder %s62, %s63
    %p75 = scmp.eq.s32.totalorder %s16, 3
    %p76 = por %p74, %p75
    %p78 = scmp.ne.s32.totalorder %s63, %s77
    %p79 = scmp.eq.s32.totalorder %s16, 0
    %p80 = por %p78, %p79
    %s81 = ssub.s32 %s17, %s29
    %s82 = ssub.s32 %s18, %s25
    %s83 = sor.u32 %s81, %s82
    %p84 = scmp.eq.s32.totalorder %s83, 0
    %s86 = sadd.s32 %s85, 1
    %s87 = scalar_select %p84, %s85, %s86
    %p90 = pneg %p84
    %p91 = scmp.eq.s32.totalorder %s10, 3
    %p92 = por %p90, %p91
    %p93 = scmp.ne.s32.totalorder %s85, %s88
    %p94 = scmp.eq.s32.totalorder %s10, 0
    %p95 = por %p93, %p94
    %p96 = scmp.ne.s32.totalorder %s85, %s88
    %p97 = scmp.eq.s32.totalorder %s15, 3
    %p98 = por %p96, %p97
    %p99 = scmp.ne.s32.totalorder %s88, %s89
    %p100 = scmp.eq.s32.totalorder %s15, 0
    %p101 = por %p99, %p100
    %p102 = scmp.ne.s32.totalorder %s88, %s89
    %p103 = scmp.eq.s32.totalorder %s16, 3
    %p104 = por %p102, %p103
    %p106 = scmp.ne.s32.totalorder %s89, %s105
    %p107 = scmp.eq.s32.totalorder %s16, 0
    %p108 = por %p106, %p107
    %s109 = smul.u32 %s17, 2
    %s110 = sadd.s32 %s109, %s18
    %s111 = smul.u32 %s29, 2
    %s112 = sadd.s32 %s111, %s25
    %s113 = ssub.s32 %s110, %s112
    %p114 = scmp.eq.s32.totalorder %s113, 0
    %s116 = sadd.s32 %s115, 1
    %s117 = scalar_select %p114, %s115, %s116
    %p120 = pneg %p114
    %p121 = scmp.eq.s32.totalorder %s10, 3
    %p122 = por %p120, %p121
    %p123 = scmp.ne.s32.totalorder %s115, %s118
    %p124 = scmp.eq.s32.totalorder %s10, 0
    %p125 = por %p123, %p124
    %p126 = scmp.ne.s32.totalorder %s115, %s118
    %p127 = scmp.eq.s32.totalorder %s15, 3
    %p128 = por %p126, %p127
    %p129 = scmp.ne.s32.totalorder %s118, %s119
    %p130 = scmp.eq.s32.totalorder %s15, 0
    %p131 = por %p129, %p130
    %p132 = scmp.ne.s32.totalorder %s118, %s119
    %p133 = scmp.eq.s32.totalorder %s16, 3
    %p134 = por %p132, %p133
    %p136 = scmp.ne.s32.totalorder %s119, %s135
    %p137 = scmp.eq.s32.totalorder %s16, 0
    %p138 = por %p136, %p137
    %p139 = scmp.le.s32.totalorder 1, %s10
    %p140 = scmp.lt.s32.totalorder %s10, 5
    %p141 = pnand %p139, %p140
    %p142 = pneg %p141
    // Predicated region
    $region9: #{conv_block_forward.2} parent=5 // pred_check
      _
    $region10: #{conv_block_forward.2} parent=5 // pred_check_branch
      %144 = sbr.rel (%p141) target = $region12
    $region11: #{conv_block_forward.2} parent=5 // pred_region
      %s145 = ssub.s32 %s10, 1
      // Predicated region
      $region13: #{conv_block_forward.2} parent=11 // pred_check
        %p146 = pneg %p73
      $region14: #{conv_block_forward.2} parent=11 // pred_check_branch
        %148 = sbr.rel (%p146) target = $region16
      $region15: #{conv_block_forward.2} parent=11 // pred_region
        _
      $region16: #{conv_block_forward.2} parent=11 // pred_fallthru
        _
    $region12: #{conv_block_forward.2} parent=5 // pred_fallthru
      _
    %p149 = scmp.lt.s32.totalorder %s10, 4
    // Predicated region
    $region17: #{conv_block_forward.2} parent=5 // pred_check
      %p150 = pneg %p149
    $region18: #{conv_block_forward.2} parent=5 // pred_check_branch
      %152 = sbr.rel (%p150) target = $region20
    $region19: #{conv_block_forward.2} parent=5 // pred_region
      // Predicated region
      $region21: #{conv_block_forward.2} parent=19 // pred_check
        %p153 = pneg %p46
      $region22: #{conv_block_forward.2} parent=19 // pred_check_branch
        %155 = sbr.rel (%p153) target = $region24
      $region23: #{conv_block_forward.2} parent=19 // pred_region
        %s156 = smul.u32 %s17, 2
        %s157 = sadd.s32 %s156, %s18
        %p158 = scmp.lt.s32.totalorder %s157, 3
        %s159 = scalar_select %p158, %s157, 3
        %s160 = smul.addr %s159, 30
        %s161 = smul.addr %s160, 8
        %s162 = scalar_lea.vmem %s0, %s161
        %s163 = smul.u32 %s17, 2
        %s164 = sadd.s32 %s163, %s18
      $region24: #{conv_block_forward.2} parent=19 // pred_fallthru
        _
    $region20: #{conv_block_forward.2} parent=5 // pred_fallthru
      _
    %p165 = scmp.le.s32.totalorder 1, %s10
    %p166 = scmp.lt.s32.totalorder %s10, 5
    %p167 = pnand %p165, %p166
    %p168 = pneg %p167
    // Predicated region
    $region25: #{conv_block_forward.2} parent=5 // pred_check
      _
    $region26: #{conv_block_forward.2} parent=5 // pred_check_branch
      %170 = sbr.rel (%p167) target = $region28
    $region27: #{conv_block_forward.2} parent=5 // pred_region
      %s171 = ssub.s32 %s10, 1
      %s172 = smul.u32 %s19, 2
      %s173 = sadd.s32 %s172, %s20
      %p174 = scmp.lt.s32.totalorder %s173, 3
      %s175 = scalar_select %p174, %s173, 3
      %s176 = smul.addr %s175, 30
      %s177 = smul.addr %s176, 8
      %s178 = scalar_lea.vmem %s0, %s177
      %p179 = pneg %p52
      %p180 = pneg %p49
      %p181 = pneg %p73
      %p182 = pneg %p70
      %p183 = pneg %p101
      %p184 = pneg %p98
      %s185 = smul.u32 8, %s20
      %p186 = scmp.lt.s32.totalorder %s19, 1
      %s187 = scalar_select %p186, %s19, 1
      %p188 = scmp.lt.s32.totalorder %s185, 15
      %s189 = scalar_select %p188, %s185, 15
      %s190 = smul.addr %s189, 2
      %s191 = smul.addr %s187, 32
      %s192 = sadd.s32 %s190, %s191
      %s193 = smul.addr %s192, 8
      %s194 = scalar_lea.vmem %s2, %s193
      %p195 = pneg %p131
      %p196 = pneg %p128
      %s197 = smul.u32 %s19, 2
      %s198 = sadd.s32 %s197, %s20
      %p199 = scmp.lt.s32.totalorder %s198, 3
      %s200 = scalar_select %p199, %s198, 3
      %s201 = smul.addr %s200, 2
      %s202 = scalar_lea.vmem %s3, %s201
      %s203 = smul.u32 %s19, 2
      %s204 = sadd.s32 %s203, %s20
      %p205 = scmp.lt.s32.totalorder %s204, 3
      %s206 = scalar_select %p205, %s204, 3
      %s207 = smul.addr %s206, 30
      %s208 = smul.addr %s207, 8
      %s209 = scalar_lea.vmem %s0, %s208
      %s210 = smul.u32 %s19, 2
      %s211 = sadd.s32 %s210, %s20
      %s212 = smul.u32 8, %s20
      %p213 = scmp.lt.s32.totalorder %s19, 1
      %s214 = scalar_select %p213, %s19, 1
      %p215 = scmp.lt.s32.totalorder %s212, 15
      %s216 = scalar_select %p215, %s212, 15
      %s217 = smul.addr %s216, 2
      %s218 = smul.addr %s214, 32
      %s219 = sadd.s32 %s217, %s218
      %s220 = smul.addr %s219, 8
      %s221 = scalar_lea.vmem %s2, %s220
      %s222 = smul.u32 8, %s20
      %s223 = smul.u32 %s19, 2
      %s224 = sadd.s32 %s223, %s20
      %p225 = scmp.lt.s32.totalorder %s224, 3
      %s226 = scalar_select %p225, %s224, 3
      %s227 = smul.addr %s226, 2
      %s228 = scalar_lea.vmem %s3, %s227
      %s229 = smul.u32 %s19, 2
      %s230 = sadd.s32 %s229, %s20
      %v231 = vld [vmem:[%s209] sm:$0xff]
      %v232 = vld [vmem:[%s209 + $0x8] sm:$0xff]
      %v233 = vld [vmem:[%s209 + $0x10] sm:$0x3]
      %v234 = vld [vmem:[%s209 + $0x18] sm:$0xff]
      %v235 = vld [vmem:[%s209 + $0x20] sm:$0xff]
      %v236 = vld [vmem:[%s209 + $0x28] sm:$0x3]
      %v237 = vld [vmem:[%s209 + $0x30] sm:$0xff]
      %v238 = vld [vmem:[%s209 + $0x38] sm:$0xff]
      %v239 = vld [vmem:[%s209 + $0x40] sm:$0x3]
      %v240 = vld [vmem:[%s209 + $0x48] sm:$0xff]
      %v241 = vld [vmem:[%s209 + $0x50] sm:$0xff]
      %v242 = vld [vmem:[%s209 + $0x58] sm:$0x3]
      %v243 = vld [vmem:[%s209 + $0x60] sm:$0xff]
      %v244 = vld [vmem:[%s209 + $0x68] sm:$0xff]
      %v245 = vld [vmem:[%s209 + $0x70] sm:$0x3]
      %v246 = vld [vmem:[%s209 + $0x78] sm:$0xff]
      %v247 = vld [vmem:[%s209 + $0x80] sm:$0xff]
      %v248 = vld [vmem:[%s209 + $0x88] sm:$0x3]
      %v249 = vld [vmem:[%s209 + $0x90] sm:$0xff]
      %v250 = vld [vmem:[%s209 + $0x98] sm:$0xff]
      %v251 = vld [vmem:[%s209 + $0xa0] sm:$0x3]
      %v252 = vld [vmem:[%s209 + $0xa8] sm:$0xff]
      %v253 = vld [vmem:[%s209 + $0xb0] sm:$0xff]
      %v254 = vld [vmem:[%s209 + $0xb8] sm:$0x3]
      %v255 = vld [vmem:[%s209 + $0xc0] sm:$0xff]
      %v256 = vld [vmem:[%s209 + $0xc8] sm:$0xff]
      %v257 = vld [vmem:[%s209 + $0xd0] sm:$0x3]
      %v258 = vld [vmem:[%s209 + $0xd8] sm:$0xff]
      %v259 = vld [vmem:[%s209 + $0xe0] sm:$0xff]
      %v260 = vld [vmem:[%s209 + $0xe8] sm:$0x3]
      %vm285 = vcmask 1046528
      %v286 = vrot.slane %v231, 1
      %v287 = vrot.slane %v232, 1
      %v288 = vsel %vm285, %v286, %v287
      %v289 = vrot.slane %v233, 1
      %v290 = vsel %vm285, %v287, %v289
      %v291 = vrot.slane %v234, 1
      %v292 = vrot.slane %v235, 1
      %v293 = vsel %vm285, %v291, %v292
      %v294 = vrot.slane %v236, 1
      %v295 = vsel %vm285, %v292, %v294
      %v296 = vrot.slane %v237, 1
      %v297 = vrot.slane %v238, 1
      %v298 = vsel %vm285, %v296, %v297
      %v299 = vrot.slane %v239, 1
      %v300 = vsel %vm285, %v297, %v299
      %v301 = vrot.slane %v240, 1
      %v302 = vrot.slane %v241, 1
      %v303 = vsel %vm285, %v301, %v302
      %v304 = vrot.slane %v242, 1
      %v305 = vsel %vm285, %v302, %v304
      %v306 = vrot.slane %v243, 1
      %v307 = vrot.slane %v244, 1
      %v308 = vsel %vm285, %v306, %v307
      %v309 = vrot.slane %v245, 1
      %v310 = vsel %vm285, %v307, %v309
      %v311 = vrot.slane %v246, 1
      %v312 = vrot.slane %v247, 1
      %v313 = vsel %vm285, %v311, %v312
      %v314 = vrot.slane %v248, 1
      %v315 = vsel %vm285, %v312, %v314
      %v316 = vrot.slane %v249, 1
      %v317 = vrot.slane %v250, 1
      %v318 = vsel %vm285, %v316, %v317
      %v319 = vrot.slane %v251, 1
      %v320 = vsel %vm285, %v317, %v319
      %v321 = vrot.slane %v252, 1
      %v322 = vrot.slane %v253, 1
      %v323 = vsel %vm285, %v321, %v322
      %v324 = vrot.slane %v254, 1
      %v325 = vsel %vm285, %v322, %v324
      %326 = vrot.lane.b32.xlu0 %v288, 8
      %v327 = vpop.permute.xlu0 %326
      %328 = vrot.lane.b32.xlu0 %v290, 8
      %v329 = vpop.permute.xlu0 %328
      %330 = vrot.lane.b32.xlu0 %v293, 8
      %v331 = vpop.permute.xlu0 %330
      %332 = vrot.lane.b32.xlu0 %v295, 8
      %v333 = vpop.permute.xlu0 %332
      %334 = vrot.lane.b32.xlu0 %v298, 8
      %v335 = vpop.permute.xlu0 %334
      %336 = vrot.lane.b32.xlu0 %v300, 8
      %v337 = vpop.permute.xlu0 %336
      %338 = vrot.lane.b32.xlu0 %v303, 8
      %v339 = vpop.permute.xlu0 %338
      %340 = vrot.lane.b32.xlu0 %v305, 8
      %v341 = vpop.permute.xlu0 %340
      %342 = vrot.lane.b32.xlu0 %v308, 8
      %v343 = vpop.permute.xlu0 %342
      %344 = vrot.lane.b32.xlu0 %v310, 8
      %v345 = vpop.permute.xlu0 %344
      %346 = vrot.lane.b32.xlu0 %v313, 8
      %v347 = vpop.permute.xlu0 %346
      %348 = vrot.lane.b32.xlu0 %v315, 8
      %v349 = vpop.permute.xlu0 %348
      %350 = vrot.lane.b32.xlu0 %v318, 8
      %v351 = vpop.permute.xlu0 %350
      %352 = vrot.lane.b32.xlu0 %v320, 8
      %v353 = vpop.permute.xlu0 %352
      %354 = vrot.lane.b32.xlu0 %v323, 8
      %v355 = vpop.permute.xlu0 %354
      %356 = vrot.lane.b32.xlu0 %v325, 8
      %v357 = vpop.permute.xlu0 %356
      %vm374 = vcmask 1045504
      %v375 = vrot.slane %v231, 2
      %v376 = vrot.slane %v232, 2
      %v377 = vsel %vm374, %v375, %v376
      %v378 = vrot.slane %v233, 2
      %v379 = vsel %vm374, %v376, %v378
      %v380 = vrot.slane %v234, 2
      %v381 = vrot.slane %v235, 2
      %v382 = vsel %vm374, %v380, %v381
      %v383 = vrot.slane %v236, 2
      %v384 = vsel %vm374, %v381, %v383
      %v385 = vrot.slane %v237, 2
      %v386 = vrot.slane %v238, 2
      %v387 = vsel %vm374, %v385, %v386
      %v388 = vrot.slane %v239, 2
      %v389 = vsel %vm374, %v386, %v388
      %v390 = vrot.slane %v240, 2
      %v391 = vrot.slane %v241, 2
      %v392 = vsel %vm374, %v390, %v391
      %v393 = vrot.slane %v242, 2
      %v394 = vsel %vm374, %v391, %v393
      %v395 = vrot.slane %v243, 2
      %v396 = vrot.slane %v244, 2
      %v397 = vsel %vm374, %v395, %v396
      %v398 = vrot.slane %v245, 2
      %v399 = vsel %vm374, %v396, %v398
      %v400 = vrot.slane %v246, 2
      %v401 = vrot.slane %v247, 2
      %v402 = vsel %vm374, %v400, %v401
      %v403 = vrot.slane %v248, 2
      %v404 = vsel %vm374, %v401, %v403
      %v405 = vrot.slane %v249, 2
      %v406 = vrot.slane %v250, 2
      %v407 = vsel %vm374, %v405, %v406
      %v408 = vrot.slane %v251, 2
      %v409 = vsel %vm374, %v406, %v408
      %v410 = vrot.slane %v252, 2
      %v411 = vrot.slane %v253, 2
      %v412 = vsel %vm374, %v410, %v411
      %v413 = vrot.slane %v254, 2
      %v414 = vsel %vm374, %v411, %v413
      %415 = vrot.lane.b32.xlu0 %v377, 16
      %v416 = vpop.permute.xlu0 %415
      %417 = vrot.lane.b32.xlu0 %v379, 16
      %v418 = vpop.permute.xlu0 %417
      %419 = vrot.lane.b32.xlu0 %v382, 16
      %v420 = vpop.permute.xlu0 %419
      %421 = vrot.lane.b32.xlu0 %v384, 16
      %v422 = vpop.permute.xlu0 %421
      %423 = vrot.lane.b32.xlu0 %v387, 16
      %v424 = vpop.permute.xlu0 %423
      %425 = vrot.lane.b32.xlu0 %v389, 16
      %v426 = vpop.permute.xlu0 %425
      %427 = vrot.lane.b32.xlu0 %v392, 16
      %v428 = vpop.permute.xlu0 %427
      %429 = vrot.lane.b32.xlu0 %v394, 16
      %v430 = vpop.permute.xlu0 %429
      %431 = vrot.lane.b32.xlu0 %v397, 16
      %v432 = vpop.permute.xlu0 %431
      %433 = vrot.lane.b32.xlu0 %v399, 16
      %v434 = vpop.permute.xlu0 %433
      %435 = vrot.lane.b32.xlu0 %v402, 16
      %v436 = vpop.permute.xlu0 %435
      %437 = vrot.lane.b32.xlu0 %v404, 16
      %v438 = vpop.permute.xlu0 %437
      %439 = vrot.lane.b32.xlu0 %v407, 16
      %v440 = vpop.permute.xlu0 %439
      %441 = vrot.lane.b32.xlu0 %v409, 16
      %v442 = vpop.permute.xlu0 %441
      %443 = vrot.lane.b32.xlu0 %v412, 16
      %v444 = vpop.permute.xlu0 %443
      %445 = vrot.lane.b32.xlu0 %v414, 16
      %v446 = vpop.permute.xlu0 %445
      %465 = vrot.lane.b32.xlu0 %v234, 24
      %v466 = vpop.permute.xlu0 %465
      %467 = vrot.lane.b32.xlu0 %v235, 24
      %v468 = vpop.permute.xlu0 %467
      %469 = vrot.lane.b32.xlu0 %v237, 24
      %v470 = vpop.permute.xlu0 %469
      %471 = vrot.lane.b32.xlu0 %v238, 24
      %v472 = vpop.permute.xlu0 %471
      %473 = vrot.lane.b32.xlu0 %v240, 24
      %v474 = vpop.permute.xlu0 %473
      %475 = vrot.lane.b32.xlu0 %v241, 24
      %v476 = vpop.permute.xlu0 %475
      %477 = vrot.lane.b32.xlu0 %v243, 24
      %v478 = vpop.permute.xlu0 %477
      %479 = vrot.lane.b32.xlu0 %v244, 24
      %v480 = vpop.permute.xlu0 %479
      %481 = vrot.lane.b32.xlu0 %v246, 24
      %v482 = vpop.permute.xlu0 %481
      %483 = vrot.lane.b32.xlu0 %v247, 24
      %v484 = vpop.permute.xlu0 %483
      %485 = vrot.lane.b32.xlu0 %v249, 24
      %v486 = vpop.permute.xlu0 %485
      %487 = vrot.lane.b32.xlu0 %v250, 24
      %v488 = vpop.permute.xlu0 %487
      %489 = vrot.lane.b32.xlu0 %v252, 24
      %v490 = vpop.permute.xlu0 %489
      %491 = vrot.lane.b32.xlu0 %v253, 24
      %v492 = vpop.permute.xlu0 %491
      %493 = vrot.lane.b32.xlu0 %v255, 24
      %v494 = vpop.permute.xlu0 %493
      %495 = vrot.lane.b32.xlu0 %v256, 24
      %v496 = vpop.permute.xlu0 %495
      %v514 = vrot.slane %v255, 1
      %v515 = vrot.slane %v256, 1
      %v516 = vsel %vm285, %v514, %v515
      %v517 = vrot.slane %v257, 1
      %v518 = vsel %vm285, %v515, %v517
      %519 = vrot.lane.b32.xlu0 %v293, 32
      %v520 = vpop.permute.xlu0 %519
      %521 = vrot.lane.b32.xlu0 %v295, 32
      %v522 = vpop.permute.xlu0 %521
      %523 = vrot.lane.b32.xlu0 %v298, 32
      %v524 = vpop.permute.xlu0 %523
      %525 = vrot.lane.b32.xlu0 %v300, 32
      %v526 = vpop.permute.xlu0 %525
      %527 = vrot.lane.b32.xlu0 %v303, 32
      %v528 = vpop.permute.xlu0 %527
      %529 = vrot.lane.b32.xlu0 %v305, 32
      %v530 = vpop.permute.xlu0 %529
      %531 = vrot.lane.b32.xlu0 %v308, 32
      %v532 = vpop.permute.xlu0 %531
      %533 = vrot.lane.b32.xlu0 %v310, 32
      %v534 = vpop.permute.xlu0 %533
      %535 = vrot.lane.b32.xlu0 %v313, 32
      %v536 = vpop.permute.xlu0 %535
      %537 = vrot.lane.b32.xlu0 %v315, 32
      %v538 = vpop.permute.xlu0 %537
      %539 = vrot.lane.b32.xlu0 %v318, 32
      %v540 = vpop.permute.xlu0 %539
      %541 = vrot.lane.b32.xlu0 %v320, 32
      %v542 = vpop.permute.xlu0 %541
      %543 = vrot.lane.b32.xlu0 %v323, 32
      %v544 = vpop.permute.xlu0 %543
      %545 = vrot.lane.b32.xlu0 %v325, 32
      %v546 = vpop.permute.xlu0 %545
      %547 = vrot.lane.b32.xlu0 %v516, 32
      %v548 = vpop.permute.xlu0 %547
      %549 = vrot.lane.b32.xlu0 %v518, 32
      %v550 = vpop.permute.xlu0 %549
      %v567 = vrot.slane %v255, 2
      %v568 = vrot.slane %v256, 2
      %v569 = vsel %vm374, %v567, %v568
      %v570 = vrot.slane %v257, 2
      %v571 = vsel %vm374, %v568, %v570
      %572 = vrot.lane.b32.xlu0 %v382, 40
      %v573 = vpop.permute.xlu0 %572
      %574 = vrot.lane.b32.xlu0 %v384, 40
      %v575 = vpop.permute.xlu0 %574
      %576 = vrot.lane.b32.xlu0 %v387, 40
      %v577 = vpop.permute.xlu0 %576
      %578 = vrot.lane.b32.xlu0 %v389, 40
      %v579 = vpop.permute.xlu0 %578
      %580 = vrot.lane.b32.xlu0 %v392, 40
      %v581 = vpop.permute.xlu0 %580
      %582 = vrot.lane.b32.xlu0 %v394, 40
      %v583 = vpop.permute.xlu0 %582
      %584 = vrot.lane.b32.xlu0 %v397, 40
      %v585 = vpop.permute.xlu0 %584
      %586 = vrot.lane.b32.xlu0 %v399, 40
      %v587 = vpop.permute.xlu0 %586
      %588 = vrot.lane.b32.xlu0 %v402, 40
      %v589 = vpop.permute.xlu0 %588
      %590 = vrot.lane.b32.xlu0 %v404, 40
      %v591 = vpop.permute.xlu0 %590
      %592 = vrot.lane.b32.xlu0 %v407, 40
      %v593 = vpop.permute.xlu0 %592
      %594 = vrot.lane.b32.xlu0 %v409, 40
      %v595 = vpop.permute.xlu0 %594
      %596 = vrot.lane.b32.xlu0 %v412, 40
      %v597 = vpop.permute.xlu0 %596
      %598 = vrot.lane.b32.xlu0 %v414, 40
      %v599 = vpop.permute.xlu0 %598
      %600 = vrot.lane.b32.xlu0 %v569, 40
      %v601 = vpop.permute.xlu0 %600
      %602 = vrot.lane.b32.xlu0 %v571, 40
      %v603 = vpop.permute.xlu0 %602
      %622 = vrot.lane.b32.xlu0 %v237, 48
      %v623 = vpop.permute.xlu0 %622
      %624 = vrot.lane.b32.xlu0 %v238, 48
      %v625 = vpop.permute.xlu0 %624
      %626 = vrot.lane.b32.xlu0 %v240, 48
      %v627 = vpop.permute.xlu0 %626
      %628 = vrot.lane.b32.xlu0 %v241, 48
      %v629 = vpop.permute.xlu0 %628
      %630 = vrot.lane.b32.xlu0 %v243, 48
      %v631 = vpop.permute.xlu0 %630
      %632 = vrot.lane.b32.xlu0 %v244, 48
      %v633 = vpop.permute.xlu0 %632
      %634 = vrot.lane.b32.xlu0 %v246, 48
      %v635 = vpop.permute.xlu0 %634
      %636 = vrot.lane.b32.xlu0 %v247, 48
      %v637 = vpop.permute.xlu0 %636
      %638 = vrot.lane.b32.xlu0 %v249, 48
      %v639 = vpop.permute.xlu0 %638
      %640 = vrot.lane.b32.xlu0 %v250, 48
      %v641 = vpop.permute.xlu0 %640
      %642 = vrot.lane.b32.xlu0 %v252, 48
      %v643 = vpop.permute.xlu0 %642
      %644 = vrot.lane.b32.xlu0 %v253, 48
      %v645 = vpop.permute.xlu0 %644
      %646 = vrot.lane.b32.xlu0 %v255, 48
      %v647 = vpop.permute.xlu0 %646
      %648 = vrot.lane.b32.xlu0 %v256, 48
      %v649 = vpop.permute.xlu0 %648
      %650 = vrot.lane.b32.xlu0 %v258, 48
      %v651 = vpop.permute.xlu0 %650
      %652 = vrot.lane.b32.xlu0 %v259, 48
      %v653 = vpop.permute.xlu0 %652
      %v671 = vrot.slane %v258, 1
      %v672 = vrot.slane %v259, 1
      %v673 = vsel %vm285, %v671, %v672
      %v674 = vrot.slane %v260, 1
      %v675 = vsel %vm285, %v672, %v674
      %676 = vrot.lane.b32.xlu0 %v298, 56
      %v677 = vpop.permute.xlu0 %676
      %678 = vrot.lane.b32.xlu0 %v300, 56
      %v679 = vpop.permute.xlu0 %678
      %680 = vrot.lane.b32.xlu0 %v303, 56
      %v681 = vpop.permute.xlu0 %680
      %682 = vrot.lane.b32.xlu0 %v305, 56
      %v683 = vpop.permute.xlu0 %682
      %684 = vrot.lane.b32.xlu0 %v308, 56
      %v685 = vpop.permute.xlu0 %684
      %686 = vrot.lane.b32.xlu0 %v310, 56
      %v687 = vpop.permute.xlu0 %686
      %688 = vrot.lane.b32.xlu0 %v313, 56
      %v689 = vpop.permute.xlu0 %688
      %690 = vrot.lane.b32.xlu0 %v315, 56
      %v691 = vpop.permute.xlu0 %690
      %692 = vrot.lane.b32.xlu0 %v318, 56
      %v693 = vpop.permute.xlu0 %692
      %694 = vrot.lane.b32.xlu0 %v320, 56
      %v695 = vpop.permute.xlu0 %694
      %696 = vrot.lane.b32.xlu0 %v323, 56
      %v697 = vpop.permute.xlu0 %696
      %698 = vrot.lane.b32.xlu0 %v325, 56
      %v699 = vpop.permute.xlu0 %698
      %700 = vrot.lane.b32.xlu0 %v516, 56
      %v701 = vpop.permute.xlu0 %700
      %702 = vrot.lane.b32.xlu0 %v518, 56
      %v703 = vpop.permute.xlu0 %702
      %704 = vrot.lane.b32.xlu0 %v673, 56
      %v705 = vpop.permute.xlu0 %704
      %706 = vrot.lane.b32.xlu0 %v675, 56
      %v707 = vpop.permute.xlu0 %706
      %v724 = vrot.slane %v258, 2
      %v725 = vrot.slane %v259, 2
      %v726 = vsel %vm374, %v724, %v725
      %v727 = vrot.slane %v260, 2
      %v728 = vsel %vm374, %v725, %v727
      %729 = vrot.lane.b32.xlu0 %v387, 64
      %v730 = vpop.permute.xlu0 %729
      %731 = vrot.lane.b32.xlu0 %v389, 64
      %v732 = vpop.permute.xlu0 %731
      %733 = vrot.lane.b32.xlu0 %v392, 64
      %v734 = vpop.permute.xlu0 %733
      %735 = vrot.lane.b32.xlu0 %v394, 64
      %v736 = vpop.permute.xlu0 %735
      %737 = vrot.lane.b32.xlu0 %v397, 64
      %v738 = vpop.permute.xlu0 %737
      %739 = vrot.lane.b32.xlu0 %v399, 64
      %v740 = vpop.permute.xlu0 %739
      %741 = vrot.lane.b32.xlu0 %v402, 64
      %v742 = vpop.permute.xlu0 %741
      %743 = vrot.lane.b32.xlu0 %v404, 64
      %v744 = vpop.permute.xlu0 %743
      %745 = vrot.lane.b32.xlu0 %v407, 64
      %v746 = vpop.permute.xlu0 %745
      %747 = vrot.lane.b32.xlu0 %v409, 64
      %v748 = vpop.permute.xlu0 %747
      %749 = vrot.lane.b32.xlu0 %v412, 64
      %v750 = vpop.permute.xlu0 %749
      %751 = vrot.lane.b32.xlu0 %v414, 64
      %v752 = vpop.permute.xlu0 %751
      %753 = vrot.lane.b32.xlu0 %v569, 64
      %v754 = vpop.permute.xlu0 %753
      %755 = vrot.lane.b32.xlu0 %v571, 64
      %v756 = vpop.permute.xlu0 %755
      %757 = vrot.lane.b32.xlu0 %v726, 64
      %v758 = vpop.permute.xlu0 %757
      %759 = vrot.lane.b32.xlu0 %v728, 64
      %v760 = vpop.permute.xlu0 %759
      %vm777 = vcmask 64512
      %v778 = vsel %vm777, %v231, %v327
      %v779 = vsel %vm777, %v232, %v329
      %v780 = vsel %vm777, %v234, %v331
      %v781 = vsel %vm777, %v235, %v333
      %v782 = vsel %vm777, %v237, %v335
      %v783 = vsel %vm777, %v238, %v337
      %v784 = vsel %vm777, %v240, %v339
      %v785 = vsel %vm777, %v241, %v341
      %v786 = vsel %vm777, %v243, %v343
      %v787 = vsel %vm777, %v244, %v345
      %v788 = vsel %vm777, %v246, %v347
      %v789 = vsel %vm777, %v247, %v349
      %v790 = vsel %vm777, %v249, %v351
      %v791 = vsel %vm777, %v250, %v353
      %v792 = vsel %vm777, %v252, %v355
      %v793 = vsel %vm777, %v253, %v357
      %vm794 = vcmask 130048
      %v795 = vsel %vm794, %v778, %v416
      %v796 = vsel %vm794, %v779, %v418
      %v797 = vsel %vm794, %v780, %v420
      %v798 = vsel %vm794, %v781, %v422
      %v799 = vsel %vm794, %v782, %v424
      %v800 = vsel %vm794, %v783, %v426
      %v801 = vsel %vm794, %v784, %v428
      %v802 = vsel %vm794, %v785, %v430
      %v803 = vsel %vm794, %v786, %v432
      %v804 = vsel %vm794, %v787, %v434
      %v805 = vsel %vm794, %v788, %v436
      %v806 = vsel %vm794, %v789, %v438
      %v807 = vsel %vm794, %v790, %v440
      %v808 = vsel %vm794, %v791, %v442
      %v809 = vsel %vm794, %v792, %v444
      %v810 = vsel %vm794, %v793, %v446
      %vm811 = vcmask 195584
      %v812 = vsel %vm811, %v795, %v466
      %v813 = vsel %vm811, %v796, %v468
      %v814 = vsel %vm811, %v797, %v470
      %v815 = vsel %vm811, %v798, %v472
      %v816 = vsel %vm811, %v799, %v474
      %v817 = vsel %vm811, %v800, %v476
      %v818 = vsel %vm811, %v801, %v478
      %v819 = vsel %vm811, %v802, %v480
      %v820 = vsel %vm811, %v803, %v482
      %v821 = vsel %vm811, %v804, %v484
      %v822 = vsel %vm811, %v805, %v486
      %v823 = vsel %vm811, %v806, %v488
      %v824 = vsel %vm811, %v807, %v490
      %v825 = vsel %vm811, %v808, %v492
      %v826 = vsel %vm811, %v809, %v494
      %v827 = vsel %vm811, %v810, %v496
      %vm828 = vcmask 261120
      %v829 = vsel %vm828, %v812, %v520
      %v830 = vsel %vm828, %v813, %v522
      %v831 = vsel %vm828, %v814, %v524
      %v832 = vsel %vm828, %v815, %v526
      %v833 = vsel %vm828, %v816, %v528
      %v834 = vsel %vm828, %v817, %v530
      %v835 = vsel %vm828, %v818, %v532
      %v836 = vsel %vm828, %v819, %v534
      %v837 = vsel %vm828, %v820, %v536
      %v838 = vsel %vm828, %v821, %v538
      %v839 = vsel %vm828, %v822, %v540
      %v840 = vsel %vm828, %v823, %v542
      %v841 = vsel %vm828, %v824, %v544
      %v842 = vsel %vm828, %v825, %v546
      %v843 = vsel %vm828, %v826, %v548
      %v844 = vsel %vm828, %v827, %v550
      %vm845 = vcmask 326656
      %v846 = vsel %vm845, %v829, %v573
      %v847 = vsel %vm845, %v830, %v575
      %v848 = vsel %vm845, %v831, %v577
      %v849 = vsel %vm845, %v832, %v579
      %v850 = vsel %vm845, %v833, %v581
      %v851 = vsel %vm845, %v834, %v583
      %v852 = vsel %vm845, %v835, %v585
      %v853 = vsel %vm845, %v836, %v587
      %v854 = vsel %vm845, %v837, %v589
      %v855 = vsel %vm845, %v838, %v591
      %v856 = vsel %vm845, %v839, %v593
      %v857 = vsel %vm845, %v840, %v595
      %v858 = vsel %vm845, %v841, %v597
      %v859 = vsel %vm845, %v842, %v599
      %v860 = vsel %vm845, %v843, %v601
      %v861 = vsel %vm845, %v844, %v603
      %vm862 = vcmask 392192
      %v863 = vsel %vm862, %v846, %v623
      %v864 = vsel %vm862, %v847, %v625
      %v865 = vsel %vm862, %v848, %v627
      %v866 = vsel %vm862, %v849, %v629
      %v867 = vsel %vm862, %v850, %v631
      %v868 = vsel %vm862, %v851, %v633
      %v869 = vsel %vm862, %v852, %v635
      %v870 = vsel %vm862, %v853, %v637
      %v871 = vsel %vm862, %v854, %v639
      %v872 = vsel %vm862, %v855, %v641
      %v873 = vsel %vm862, %v856, %v643
      %v874 = vsel %vm862, %v857, %v645
      %v875 = vsel %vm862, %v858, %v647
      %v876 = vsel %vm862, %v859, %v649
      %v877 = vsel %vm862, %v860, %v651
      %v878 = vsel %vm862, %v861, %v653
      %vm879 = vcmask 457728
      %v880 = vsel %vm879, %v863, %v677
      %v881 = vsel %vm879, %v864, %v679
      %v882 = vsel %vm879, %v865, %v681
      %v883 = vsel %vm879, %v866, %v683
      %v884 = vsel %vm879, %v867, %v685
      %v885 = vsel %vm879, %v868, %v687
      %v886 = vsel %vm879, %v869, %v689
      %v887 = vsel %vm879, %v870, %v691
      %v888 = vsel %vm879, %v871, %v693
      %v889 = vsel %vm879, %v872, %v695
      %v890 = vsel %vm879, %v873, %v697
      %v891 = vsel %vm879, %v874, %v699
      %v892 = vsel %vm879, %v875, %v701
      %v893 = vsel %vm879, %v876, %v703
      %v894 = vsel %vm879, %v877, %v705
      %v895 = vsel %vm879, %v878, %v707
      %vm896 = vcmask 523264
      %v897 = vsel %vm896, %v880, %v730
      %v898 = vsel %vm896, %v881, %v732
      %v899 = vsel %vm896, %v882, %v734
      %v900 = vsel %vm896, %v883, %v736
      %v901 = vsel %vm896, %v884, %v738
      %v902 = vsel %vm896, %v885, %v740
      %v903 = vsel %vm896, %v886, %v742
      %v904 = vsel %vm896, %v887, %v744
      %v905 = vsel %vm896, %v888, %v746
      %v906 = vsel %vm896, %v889, %v748
      %v907 = vsel %vm896, %v890, %v750
      %v908 = vsel %vm896, %v891, %v752
      %v909 = vsel %vm896, %v892, %v754
      %v910 = vsel %vm896, %v893, %v756
      %v911 = vsel %vm896, %v894, %v758
      %v912 = vsel %vm896, %v895, %v760
      %v913 = vld [vmem:[%s1] sm:$0xff]
      %v914 = vld [vmem:[%s1 + $0x8] sm:$0xff]
      %v915 = vld [vmem:[%s1 + $0x10] sm:$0xff]
      %v916 = vld [vmem:[%s1 + $0x18] sm:$0xff]
      %v917 = vld [vmem:[%s1 + $0x20] sm:$0xff]
      %v918 = vld [vmem:[%s1 + $0x28] sm:$0xff]
      %v919 = vld [vmem:[%s1 + $0x30] sm:$0xff]
      %v920 = vld [vmem:[%s1 + $0x38] sm:$0xff]
      %v921 = vld [vmem:[%s1 + $0x40] sm:$0xff]
      %vm922 = vcmask 588800
      %v924 = vsel %vm922, %v897, 0
      %v927 = vsel %vm922, %v898, 0
      %v930 = vsel %vm922, %v899, 0
      %v933 = vsel %vm922, %v900, 0
      %v936 = vsel %vm922, %v901, 0
      %v939 = vsel %vm922, %v902, 0
      %v942 = vsel %vm922, %v903, 0
      %v945 = vsel %vm922, %v904, 0
      %v948 = vsel %vm922, %v905, 0
      %v951 = vsel %vm922, %v906, 0
      %v954 = vsel %vm922, %v907, 0
      %v957 = vsel %vm922, %v908, 0
      %v960 = vsel %vm922, %v909, 0
      %v963 = vsel %vm922, %v910, 0
      %v966 = vsel %vm922, %v911, 0
      %v969 = vsel %vm922, %v912, 0
      %971 = vmatpush.msra.mxu0 0.0
      %972 = vmatpush.msra.mxu0 0.0
      %973 = vmatpush.msra.mxu0 0.0
      %974 = vmatpush.msra.mxu0 0.0
      %975 = vmatpush.msra.mxu0 0.0
      %976 = vmatpush.msra.mxu0 0.0
      %977 = vmatpush.msra.mxu0 0.0
      %978 = vmatpush.msra.mxu0 %v921
      %979 = vmatpush.msra.mxu0 %v920
      %980 = vmatpush.msra.mxu0 %v919
      %981 = vmatpush.msra.mxu0 %v918
      %982 = vmatpush.msra.mxu0 %v917
      %983 = vmatpush.msra.mxu0 %v916
      %984 = vmatpush.msra.mxu0 %v915
      %985 = vmatpush.msra.mxu0 %v914
      %986 = vmatpush.msra.mxu0 %v913
      %987 = vmatmul.f32.gmra.mxu0 %v924
      %v988 = vpop.f32.mrf.mxu0
      %v989 = vadd.f32 0.0, %v988
      %990 = vmatmul.f32.gmra.mxu0 %v927
      %v991 = vpop.f32.mrf.mxu0
      %v992 = vadd.f32 0.0, %v991
      %993 = vmatmul.f32.gmra.mxu0 %v930
      %v994 = vpop.f32.mrf.mxu0
      %v995 = vadd.f32 0.0, %v994
      %996 = vmatmul.f32.gmra.mxu0 %v933
      %v997 = vpop.f32.mrf.mxu0
      %v998 = vadd.f32 0.0, %v997
      %999 = vmatmul.f32.gmra.mxu0 %v936
      %v1000 = vpop.f32.mrf.mxu0
      %v1001 = vadd.f32 0.0, %v1000
      %1002 = vmatmul.f32.gmra.mxu0 %v939
      %v1003 = vpop.f32.mrf.mxu0
      %v1004 = vadd.f32 0.0, %v1003
      %1005 = vmatmul.f32.gmra.mxu0 %v942
      %v1006 = vpop.f32.mrf.mxu0
      %v1007 = vadd.f32 0.0, %v1006
      %1008 = vmatmul.f32.gmra.mxu0 %v945
      %v1009 = vpop.f32.mrf.mxu0
      %v1010 = vadd.f32 0.0, %v1009
      %1011 = vmatmul.f32.gmra.mxu0 %v948
      %v1012 = vpop.f32.mrf.mxu0
      %v1013 = vadd.f32 0.0, %v1012
      %1014 = vmatmul.f32.gmra.mxu0 %v951
      %v1015 = vpop.f32.mrf.mxu0
      %v1016 = vadd.f32 0.0, %v1015
      %1017 = vmatmul.f32.gmra.mxu0 %v954
      %v1018 = vpop.f32.mrf.mxu0
      %v1019 = vadd.f32 0.0, %v1018
      %1020 = vmatmul.f32.gmra.mxu0 %v957
      %v1021 = vpop.f32.mrf.mxu0
      %v1022 = vadd.f32 0.0, %v1021
      %1023 = vmatmul.f32.gmra.mxu0 %v960
      %v1024 = vpop.f32.mrf.mxu0
      %v1025 = vadd.f32 0.0, %v1024
      %1026 = vmatmul.f32.gmra.mxu0 %v963
      %v1027 = vpop.f32.mrf.mxu0
      %v1028 = vadd.f32 0.0, %v1027
      %1029 = vmatmul.f32.gmra.mxu0 %v966
      %v1030 = vpop.f32.mrf.mxu0
      %v1031 = vadd.f32 0.0, %v1030
      %1032 = vmatmul.f32.gmra.mxu0 %v969
      %v1033 = vpop.f32.mrf.mxu0
      %v1034 = vadd.f32 0.0, %v1033
      %1035 = vdwg.mxu0
      %1036 = vst [vmem:[%s221] sm:$0xff] %v989
      %1037 = vst [vmem:[%s221 + $0x8] sm:$0xff] %v992
      %1038 = vst [vmem:[%s221 + $0x10] sm:$0xff] %v995
      %1039 = vst [vmem:[%s221 + $0x18] sm:$0xff] %v998
      %1040 = vst [vmem:[%s221 + $0x20] sm:$0xff] %v1001
      %1041 = vst [vmem:[%s221 + $0x28] sm:$0xff] %v1004
      %1042 = vst [vmem:[%s221 + $0x30] sm:$0xff] %v1007
      %1043 = vst [vmem:[%s221 + $0x38] sm:$0xff] %v1010
      %1044 = vst [vmem:[%s221 + $0x40] sm:$0xff] %v1013
      %1045 = vst [vmem:[%s221 + $0x48] sm:$0xff] %v1016
      %1046 = vst [vmem:[%s221 + $0x50] sm:$0xff] %v1019
      %1047 = vst [vmem:[%s221 + $0x58] sm:$0xff] %v1022
      %1048 = vst [vmem:[%s221 + $0x60] sm:$0xff] %v1025
      %1049 = vst [vmem:[%s221 + $0x68] sm:$0xff] %v1028
      %1050 = vst [vmem:[%s221 + $0x70] sm:$0xff] %v1031
      %1051 = vst [vmem:[%s221 + $0x78] sm:$0xff] %v1034
      %v1052 = vadd.f32 %v989, %v992
      %v1053 = vadd.f32 %v1052, %v995
      %v1054 = vadd.f32 %v1053, %v998
      %v1055 = vadd.f32 %v1054, %v1001
      %v1056 = vadd.f32 %v1055, %v1004
      %v1057 = vadd.f32 %v1056, %v1007
      %v1058 = vadd.f32 %v1057, %v1010
      %v1059 = vadd.f32 %v1058, %v1013
      %v1060 = vadd.f32 %v1059, %v1016
      %v1061 = vadd.f32 %v1060, %v1019
      %v1062 = vadd.f32 %v1061, %v1022
      %v1063 = vadd.f32 %v1062, %v1025
      %v1064 = vadd.f32 %v1063, %v1028
      %v1065 = vadd.f32 %v1064, %v1031
      %v1066 = vadd.f32 %v1065, %v1034
      %v1067 = vrot.slane %v1066, 4
      %v1068 = vadd.f32 %v1066, %v1067
      %v1069 = vrot.slane %v1068, 2
      %v1070 = vadd.f32 %v1068, %v1069
      %v1071 = vrot.slane %v1070, 1
      %v1072 = vadd.f32 %v1070, %v1071
      %v1073 = vmul.f32 %v989, %v989
      %v1074 = vmul.f32 %v992, %v992
      %v1075 = vmul.f32 %v995, %v995
      %v1076 = vmul.f32 %v998, %v998
      %v1077 = vmul.f32 %v1001, %v1001
      %v1078 = vmul.f32 %v1004, %v1004
      %v1079 = vmul.f32 %v1007, %v1007
      %v1080 = vmul.f32 %v1010, %v1010
      %v1081 = vmul.f32 %v1013, %v1013
      %v1082 = vmul.f32 %v1016, %v1016
      %v1083 = vmul.f32 %v1019, %v1019
      %v1084 = vmul.f32 %v1022, %v1022
      %v1085 = vmul.f32 %v1025, %v1025
      %v1086 = vmul.f32 %v1028, %v1028
      %v1087 = vmul.f32 %v1031, %v1031
      %v1088 = vmul.f32 %v1034, %v1034
      %v1089 = vadd.f32 %v1073, %v1074
      %v1090 = vadd.f32 %v1089, %v1075
      %v1091 = vadd.f32 %v1090, %v1076
      %v1092 = vadd.f32 %v1091, %v1077
      %v1093 = vadd.f32 %v1092, %v1078
      %v1094 = vadd.f32 %v1093, %v1079
      %v1095 = vadd.f32 %v1094, %v1080
      %v1096 = vadd.f32 %v1095, %v1081
      %v1097 = vadd.f32 %v1096, %v1082
      %v1098 = vadd.f32 %v1097, %v1083
      %v1099 = vadd.f32 %v1098, %v1084
      %v1100 = vadd.f32 %v1099, %v1085
      %v1101 = vadd.f32 %v1100, %v1086
      %v1102 = vadd.f32 %v1101, %v1087
      %v1103 = vadd.f32 %v1102, %v1088
      %v1104 = vrot.slane %v1103, 4
      %v1105 = vadd.f32 %v1103, %v1104
      %v1106 = vrot.slane %v1105, 2
      %v1107 = vadd.f32 %v1105, %v1106
      %v1108 = vrot.slane %v1107, 1
      %v1109 = vadd.f32 %v1107, %v1108
      %vm1110 = vcmask 1040384
      %v1111 = vsel %vm1110, %v1072, %v1109
      %1112 = vst [vmem:[%s228] sm:$0x3] %v1111
      %s1113 = smul.u32 8, %s20
      %p1114 = scmp.lt.s32.totalorder %s19, 1
      %s1115 = scalar_select %p1114, %s19, 1
      %p1116 = scmp.lt.s32.totalorder %s1113, 15
      %s1117 = scalar_select %p1116, %s1113, 15
      %s1118 = smul.addr %s1117, 2
      %s1119 = smul.addr %s1115, 32
      %s1120 = sadd.s32 %s1118, %s1119
      %s1121 = smul.addr %s1120, 8
      %s1122 = scalar_lea.vmem %s2, %s1121
      %s1123 = smul.u32 %s19, 2
      %s1124 = sadd.s32 %s1123, %s20
      %p1125 = scmp.lt.s32.totalorder %s1124, 3
      %s1126 = scalar_select %p1125, %s1124, 3
      %s1127 = smul.addr %s1126, 2
      %s1128 = scalar_lea.vmem %s3, %s1127
      // Predicated region
      $region29: #{conv_block_forward.2} parent=27 // pred_check
        %p1129 = pneg %p98
      $region30: #{conv_block_forward.2} parent=27 // pred_check_branch
        %1131 = sbr.rel (%p1129) target = $region32
      $region31: #{conv_block_forward.2} parent=27 // pred_region
        %s1132 = smul.u32 8, %s20
      $region32: #{conv_block_forward.2} parent=27 // pred_fallthru
        _
      // Predicated region
      $region33: #{conv_block_forward.2} parent=27 // pred_check
        %p1133 = pneg %p128
      $region34: #{conv_block_forward.2} parent=27 // pred_check_branch
        %1135 = sbr.rel (%p1133) target = $region36
      $region35: #{conv_block_forward.2} parent=27 // pred_region
        %s1136 = smul.u32 %s19, 2
        %s1137 = sadd.s32 %s1136, %s20
      $region36: #{conv_block_forward.2} parent=27 // pred_fallthru
        _
    $region28: #{conv_block_forward.2} parent=5 // pred_fallthru
      _
    %p1138 = scmp.le.s32.totalorder 2, %s10
    // Predicated region
    $region37: #{conv_block_forward.2} parent=5 // pred_check
      %p1139 = pneg %p1138
    $region38: #{conv_block_forward.2} parent=5 // pred_check_branch
      %1141 = sbr.rel (%p1139) target = $region40
    $region39: #{conv_block_forward.2} parent=5 // pred_region
      %s1142 = ssub.s32 %s10, 2
      // Predicated region
      $region41: #{conv_block_forward.2} parent=39 // pred_check
        %p1143 = pneg %p104
      $region42: #{conv_block_forward.2} parent=39 // pred_check_branch
        %1145 = sbr.rel (%p1143) target = $region44
      $region43: #{conv_block_forward.2} parent=39 // pred_region
        %s1146 = smul.u32 8, %s22
        %p1147 = scmp.lt.s32.totalorder %s21, 1
        %s1148 = scalar_select %p1147, %s21, 1
        %p1149 = scmp.lt.s32.totalorder %s1146, 15
        %s1150 = scalar_select %p1149, %s1146, 15
        %s1151 = smul.addr %s1150, 2
        %s1152 = smul.addr %s1148, 32
        %s1153 = sadd.s32 %s1151, %s1152
        %s1154 = smul.addr %s1153, 8
        %s1155 = scalar_lea.vmem %s2, %s1154
      $region44: #{conv_block_forward.2} parent=39 // pred_fallthru
        _
      // Predicated region
      $region45: #{conv_block_forward.2} parent=39 // pred_check
        %p1156 = pneg %p134
      $region46: #{conv_block_forward.2} parent=39 // pred_check_branch
        %1158 = sbr.rel (%p1156) target = $region48
      $region47: #{conv_block_forward.2} parent=39 // pred_region
        %s1159 = smul.u32 %s21, 2
        %s1160 = sadd.s32 %s1159, %s22
        %p1161 = scmp.lt.s32.totalorder %s1160, 3
        %s1162 = scalar_select %p1161, %s1160, 3
        %s1163 = smul.addr %s1162, 2
        %s1164 = scalar_lea.vmem %s3, %s1163
      $region48: #{conv_block_forward.2} parent=39 // pred_fallthru
        _
    $region40: #{conv_block_forward.2} parent=5 // pred_fallthru
      _
  $region6: #{conv_block_forward.2} parent=0 // loop_footer
    %s14 = sadd.s32 1, %s10
  $region7: #{conv_block_forward.2} parent=0 // loop_footer_branch
    %9 = sbr.rel target = $region3
  $region8: #{conv_block_forward.2} parent=0 // loop_exit
    _

</llo_original>
